<compile_context>
chip_gen: v7x
topology: tpu7x:2x2x1
jax: 0.10.0
libtpu: 0.0.40
codegen_flags: <defaults>
</compile_context>

<pallas_src>
import functools
import math

import jax
import jax.numpy as jnp
from jax import lax
from jax.experimental import pallas as pl
from jax.experimental.pallas import tpu as pltpu


# ----------------------------------------------------------------------------
# Helpers
# ----------------------------------------------------------------------------
def _vmem_limit_bytes():
    """Scoped-VMEM budget: ~3/4 of physical VMEM, capped at 96 MiB (v7x -> 48 MiB)."""
    try:
        cap = pltpu.get_tpu_info().vmem_capacity_bytes
        return int(min(96 * 1024 * 1024, cap * 3 // 4))
    except Exception:  # pragma: no cover - conservative fallback
        return 48 * 1024 * 1024


def _pick_tile(n, target):
    """Largest multiple-of-8 tile <= target that divides n (falls back to n itself)."""
    if n <= target:
        return n
    t = (target // 8) * 8
    while t >= 8:
        if n % t == 0:
            return t
        t -= 8
    return n


# ----------------------------------------------------------------------------
# Kernels
# ----------------------------------------------------------------------------
def _qkv_proj_kernel(xq_ref, xk_ref, xv_ref,
                     wq_ref, bq_ref, wk_ref, bk_ref, wv_ref, bv_ref,
                     q_ref, k_ref, v_ref):
    """Fused Q/K/V linear projections; weights are VMEM-resident across the row grid."""
    def proj(x_ref, w_ref, b_ref, o_ref):
        acc = jnp.dot(x_ref[...], w_ref[...], preferred_element_type=jnp.float32)
        o_ref[...] = (acc + b_ref[...]).astype(o_ref.dtype)

    proj(xq_ref, wq_ref, bq_ref, q_ref)
    proj(xk_ref, wk_ref, bk_ref, k_ref)
    proj(xv_ref, wv_ref, bv_ref, v_ref)


def _linear_kernel(x_ref, w_ref, b_ref, o_ref):
    """Plain y = x @ W + b with the weight VMEM-resident across the row grid."""
    acc = jnp.dot(x_ref[...], w_ref[...], preferred_element_type=jnp.float32)
    o_ref[...] = (acc + b_ref[...]).astype(o_ref.dtype)


def _attn_kernel(q_ref, k_ref, v_ref, bias_ref, ctx_ref, attn_ref, *, scale):
    """Per-(batch, head, query-tile) scaled dot-product attention."""
    qh = q_ref[...]                      # [TQ, dk]  (compute dtype)
    kh = k_ref[...]                      # [S,  dk]
    vh = v_ref[...]                      # [S,  dk]

    # q @ k^T via trans_b dimension numbers -> MXU-native, no materialized transpose.
    scores = lax.dot_general(qh, kh, (((1,), (1,)), ((), ())),
                             preferred_element_type=jnp.float32) * scale      # [TQ, S] f32
    scores = scores + bias_ref[...]      # additive mask bias, [1, S] or [TQ, S] broadcast

    smax = jnp.max(scores, axis=-1, keepdims=True)
    e = jnp.exp(scores - smax)
    inv = pl.reciprocal(jnp.sum(e, axis=-1, keepdims=True), approx=True)      # EUP slot
    p = e * inv                                                               # [TQ, S] f32
    # TODO(synk): nn.Dropout(p=0.1) on p_attn is training-only randomness; eval identity.
    attn_ref[...] = p.astype(attn_ref.dtype)

    ctx = jnp.dot(p.astype(vh.dtype), vh, preferred_element_type=jnp.float32)  # [TQ, dk]
    ctx_ref[...] = ctx.astype(ctx_ref.dtype)


# ----------------------------------------------------------------------------
# pallas_call wrappers
# ----------------------------------------------------------------------------
def _project_qkv(xq, xk, xv, wq, bq, wk, bk, wv, bv, out_dtype, vmem_limit):
    R, D = xq.shape
    TM = _pick_tile(R, 512)
    x_spec = pl.BlockSpec((TM, D), lambda i: (i, 0))
    w_spec = pl.BlockSpec((D, D), lambda i: (0, 0))   # constant block index -> DMA'd once
    b_spec = pl.BlockSpec((1, D), lambda i: (0, 0))
    o_spec = pl.BlockSpec((TM, D), lambda i: (i, 0))

    cd_bytes = jnp.dtype(out_dtype).itemsize
    cost = pl.CostEstimate(
        flops=2 * 3 * R * D * D,
        transcendentals=0,
        bytes_accessed=3 * (R * D * xq.dtype.itemsize + D * D * wq.dtype.itemsize
                            + D * 4 + R * D * cd_bytes),
    )
    return pl.pallas_call(
        _qkv_proj_kernel,
        out_shape=tuple(jax.ShapeDtypeStruct((R, D), out_dtype) for _ in range(3)),
        grid_spec=pltpu.PrefetchScalarGridSpec(
            num_scalar_prefetch=0,
            grid=(R // TM,),
            in_specs=[x_spec, x_spec, x_spec,
                      w_spec, b_spec, w_spec, b_spec, w_spec, b_spec],
            out_specs=(o_spec, o_spec, o_spec),
        ),
        compiler_params=pltpu.CompilerParams(
            dimension_semantics=("parallel",),
            vmem_limit_bytes=vmem_limit,
        ),
        cost_estimate=cost,
    )(xq, xk, xv, wq, bq, wk, bk, wv, bv)


def _project_out(x, w, b, out_dtype, vmem_limit):
    R, D = x.shape
    Dout = w.shape[1]
    TM = _pick_tile(R, 512)
    cost = pl.CostEstimate(
        flops=2 * R * D * Dout,
        transcendentals=0,
        bytes_accessed=(R * D * x.dtype.itemsize + D * Dout * w.dtype.itemsize
                        + Dout * 4 + R * Dout * jnp.dtype(out_dtype).itemsize),
    )
    return pl.pallas_call(
        _linear_kernel,
        out_shape=jax.ShapeDtypeStruct((R, Dout), out_dtype),
        grid_spec=pltpu.PrefetchScalarGridSpec(
            num_scalar_prefetch=0,
            grid=(R // TM,),
            in_specs=[pl.BlockSpec((TM, D), lambda i: (i, 0)),
                      pl.BlockSpec((D, Dout), lambda i: (0, 0)),
                      pl.BlockSpec((1, Dout), lambda i: (0, 0))],
            out_specs=pl.BlockSpec((TM, Dout), lambda i: (i, 0)),
        ),
        compiler_params=pltpu.CompilerParams(
            dimension_semantics=("parallel",),
            vmem_limit_bytes=vmem_limit,
        ),
        cost_estimate=cost,
    )(x, w, b)


@functools.partial(jax.jit,
                   static_argnames=("n_heads", "compute_dtype", "attn_dtype", "q_tile"))
def multi_headed_attention(query, key, value, mask, params, *, n_heads,
                           compute_dtype=jnp.bfloat16, attn_dtype=jnp.bfloat16,
                           q_tile=None):
    """MultiHeadedAttention forward.

    query/key/value: [B, S, d_model] f32.  mask: None, [B, S], [B, 1, S] key-padding, or
    full [B, S, S].  params: dict of wq/wk/wv/wo stored [in, out] and bq/bk/bv/bo [d_model]
    (weights may be pre-cast to `compute_dtype` by the caller to avoid a per-call cast).
    Returns (output [B, S, d_model] f32, attention probs [B, H, S, S] attn_dtype).
    """
    B, S, D = query.shape
    H = n_heads
    assert D % H == 0
    dk = D // H
    cd = compute_dtype
    vmem_limit = _vmem_limit_bytes()

    wq = jnp.asarray(params["wq"], cd)
    wk = jnp.asarray(params["wk"], cd)
    wv = jnp.asarray(params["wv"], cd)
    wo = jnp.asarray(params["wo"], cd)
    bq = jnp.asarray(params["bq"], jnp.float32).reshape(1, D)
    bk = jnp.asarray(params["bk"], jnp.float32).reshape(1, D)
    bv = jnp.asarray(params["bv"], jnp.float32).reshape(1, D)
    bo = jnp.asarray(params["bo"], jnp.float32).reshape(1, D)

    # ---- Pass 1: fused Q/K/V projections (weights resident, bf16 outputs). ----
    xq = query.astype(cd).reshape(B * S, D)
    xk = key.astype(cd).reshape(B * S, D)
    xv = value.astype(cd).reshape(B * S, D)
    q_proj, k_proj, v_proj = _project_qkv(xq, xk, xv, wq, bq, wk, bk, wv, bv, cd, vmem_limit)
    q_proj = q_proj.reshape(B, S, D)
    k_proj = k_proj.reshape(B, S, D)
    v_proj = v_proj.reshape(B, S, D)

    # ---- Mask -> additive f32 bias: [B, 1, S] (key padding) or [B, S, S] (full mask). ----
    if mask is None:
        bias = jnp.zeros((B, 1, S), jnp.float32)
    else:
        m = mask
        if m.ndim == 2:
            m = m[:, None, :]
        bias = jnp.where(m == 0, -1e9, 0.0).astype(jnp.float32)
    Mq = bias.shape[1]

    # ---- Pass 2: per-head attention.  Grid (B, H, qi): K/V stripes fetched once per (b,h). --
    TQ = q_tile if q_tile is not None else _pick_tile(S, 256)
    assert S % TQ == 0 and (TQ % 8 == 0 or TQ == S)
    grid = (B, H, S // TQ)
    scale = 1.0 / math.sqrt(dk)

    head_stripe = (dk % 128 == 0)
    if head_stripe:
        # Per-head stripes sliced straight out of [B, S, D]; context written directly into
        # the concat-heads [B, S, D] layout (lane-dense, no host transpose).
        q_in, k_in, v_in = q_proj, k_proj, v_proj
        q_spec = pl.BlockSpec((None, TQ, dk), lambda b, h, qi: (b, qi, h))
        kv_spec = pl.BlockSpec((None, S, dk), lambda b, h, qi: (b, 0, h))
        ctx_shape = jax.ShapeDtypeStruct((B, S, D), cd)
        ctx_spec = pl.BlockSpec((None, TQ, dk), lambda b, h, qi: (b, qi, h))
    else:
        # General d_k (64 / 96 / ...): head-major layout so the last block dim equals dk.
        def to_heads(x):
            return x.reshape(B, S, H, dk).transpose(0, 2, 1, 3)
        q_in, k_in, v_in = to_heads(q_proj), to_heads(k_proj), to_heads(v_proj)
        q_spec = pl.BlockSpec((None, None, TQ, dk), lambda b, h, qi: (b, h, qi, 0))
        kv_spec = pl.BlockSpec((None, None, S, dk), lambda b, h, qi: (b, h, 0, 0))
        ctx_shape = jax.ShapeDtypeStruct((B, H, S, dk), cd)
        ctx_spec = pl.BlockSpec((None, None, TQ, dk), lambda b, h, qi: (b, h, qi, 0))

    if Mq == 1:
        bias_spec = pl.BlockSpec((None, 1, S), lambda b, h, qi: (b, 0, 0))
    else:
        bias_spec = pl.BlockSpec((None, TQ, S), lambda b, h, qi: (b, qi, 0))
    attn_spec = pl.BlockSpec((None, None, TQ, S), lambda b, h, qi: (b, h, qi, 0))

    cd_bytes = jnp.dtype(cd).itemsize
    attn_bytes = jnp.dtype(attn_dtype).itemsize
    cost = pl.CostEstimate(
        flops=2 * 2 * B * H * S * S * dk,                 # QK^T and P@V
        transcendentals=B * H * S * S,                    # exp (reciprocal is ~B*H*S)
        bytes_accessed=(B * S * D * cd_bytes              # q
                        + 2 * B * S * D * cd_bytes        # k, v (each stripe fetched once)
                        + B * Mq * S * 4                  # mask bias
                        + B * S * D * cd_bytes            # context out
                        + B * H * S * S * attn_bytes),    # attention probs out
    )

    ctx, attn = pl.pallas_call(
        functools.partial(_attn_kernel, scale=scale),
        out_shape=(ctx_shape, jax.ShapeDtypeStruct((B, H, S, S), attn_dtype)),
        grid_spec=pltpu.PrefetchScalarGridSpec(
            num_scalar_prefetch=0,
            grid=grid,
            in_specs=[q_spec, kv_spec, kv_spec, bias_spec],
            out_specs=(ctx_spec, attn_spec),
        ),
        compiler_params=pltpu.CompilerParams(
            dimension_semantics=("parallel", "parallel", "parallel"),
            vmem_limit_bytes=vmem_limit,
        ),
        cost_estimate=cost,
    )(q_in, k_in, v_in, bias)

    if not head_stripe:
        ctx = ctx.transpose(0, 2, 1, 3).reshape(B, S, D)   # concat heads

    # ---- Pass 3: output projection (W_o resident), f32 output. ----
    out = _project_out(ctx.reshape(B * S, D), wo, bo, jnp.float32, vmem_limit)
    return out.reshape(B, S, D), attn


# ----------------------------------------------------------------------------
# Pure-JAX reference (mirrors the kernel's bf16-matmul / f32-accumulate numerics)
# ----------------------------------------------------------------------------
def mha_reference(query, key, value, mask, params, n_heads, compute_dtype=jnp.bfloat16):
    B, S, D = query.shape
    dk = D // n_heads
    cd = compute_dtype

    def proj(x, w, b):
        return (jnp.dot(x.astype(cd), w.astype(cd), preferred_element_type=jnp.float32)
                + b.astype(jnp.float32)).astype(cd)

    def split(x):
        return x.reshape(B, S, n_heads, dk).transpose(0, 2, 1, 3)

    qh = split(proj(query, params["wq"], params["bq"]))
    kh = split(proj(key, params["wk"], params["bk"]))
    vh = split(proj(value, params["wv"], params["bv"]))
    scores = jnp.einsum("bhqd,bhkd->bhqk", qh, kh,
                        preferred_element_type=jnp.float32) / math.sqrt(dk)
    if mask is not None:
        m = mask if mask.ndim == 3 else mask[:, None, :]
        scores = jnp.where(m[:, None, :, :] == 0, -1e9, scores)
    smax = jnp.max(scores, axis=-1, keepdims=True)
    e = jnp.exp(scores - smax)
    p = e / jnp.sum(e, axis=-1, keepdims=True)
    ctx = jnp.einsum("bhqk,bhkd->bhqd", p.astype(cd), vh,
                     preferred_element_type=jnp.float32).astype(cd)
    ctx = ctx.transpose(0, 2, 1, 3).reshape(B, S, D)
    out = jnp.dot(ctx, params["wo"].astype(cd),
                  preferred_element_type=jnp.float32) + params["bo"]
    return out, p


# ----------------------------------------------------------------------------
# Demo / self-test
# ----------------------------------------------------------------------------
if __name__ == "__main__":
    root = jax.random.PRNGKey(0)

    def init_params(key, d_model):
        ks = jax.random.split(key, 8)
        bound = 1.0 / math.sqrt(d_model)   # nn.Linear default init

        def lin(kw, kb):
            w = jax.random.uniform(kw, (d_model, d_model), jnp.float32, -bound, bound)
            b = jax.random.uniform(kb, (d_model,), jnp.float32, -bound, bound)
            return w, b

        wq, bq = lin(ks[0], ks[1])
        wk, bk = lin(ks[2], ks[3])
        wv, bv = lin(ks[4], ks[5])
        wo, bo = lin(ks[6], ks[7])
        return dict(wq=wq, bq=bq, wk=wk, bk=bk, wv=wv, bv=bv, wo=wo, bo=bo)

    def run_case(key, B, S, H, d_model, mask):
        kq, kk, kv, kp = jax.random.split(key, 4)
        q = jax.random.normal(kq, (B, S, d_model), jnp.float32)
        k = jax.random.normal(kk, (B, S, d_model), jnp.float32)
        v = jax.random.normal(kv, (B, S, d_model), jnp.float32)
        params = init_params(kp, d_model)

        out, attn = multi_headed_attention(q, k, v, mask, params, n_heads=H)
        out = jax.block_until_ready(out)
        attn = jax.block_until_ready(attn)

        ref_out, ref_attn = mha_reference(q, k, v, mask, params, n_heads=H)
        assert out.shape == (B, S, d_model) and attn.shape == (B, H, S, S)
        assert jnp.allclose(out, ref_out, atol=2e-2, rtol=2e-2), "output mismatch"
        assert jnp.allclose(attn.astype(jnp.float32), ref_attn, atol=2e-2, rtol=2e-2), \
            "attention probs mismatch"

    B, S = 2, 8
    k1, k2 = jax.random.split(root)

    # Case 1: d_k = 128 (per-head stripe BlockSpecs, direct concat-heads ctx layout),
    #         key-padding mask hiding the last two keys of batch 1.
    pad_mask = jnp.ones((B, 1, S), jnp.int32).at[1, 0, S - 2:].set(0)
    run_case(k1, B, S, H=2, d_model=256, mask=pad_mask)

    # Case 2: d_k = 64 (head-major layout path), full [B, S, S] causal mask.
    causal = jnp.broadcast_to(jnp.tril(jnp.ones((S, S), jnp.int32))[None], (B, S, S))
    run_case(k2, B, S, H=4, d_model=256, mask=causal)

    print("KERNEL_OK")
</pallas_src>

<mosaic_0001>
module attributes {stable_mosaic.version = 11 : i64} {
  func.func @_qkv_proj_kernel(%arg0: i32, %arg1: memref<16x256xbf16, #tpu.memory_space<vmem>>, %arg2: memref<16x256xbf16, #tpu.memory_space<vmem>>, %arg3: memref<16x256xbf16, #tpu.memory_space<vmem>>, %arg4: memref<256x256xbf16, #tpu.memory_space<vmem>>, %arg5: memref<1x256xf32, #tpu.memory_space<vmem>>, %arg6: memref<256x256xbf16, #tpu.memory_space<vmem>>, %arg7: memref<1x256xf32, #tpu.memory_space<vmem>>, %arg8: memref<256x256xbf16, #tpu.memory_space<vmem>>, %arg9: memref<1x256xf32, #tpu.memory_space<vmem>>, %arg10: memref<16x256xbf16, #tpu.memory_space<vmem>>, %arg11: memref<16x256xbf16, #tpu.memory_space<vmem>>, %arg12: memref<16x256xbf16, #tpu.memory_space<vmem>>) attributes {dimension_semantics = [#tpu.dimension_semantics<parallel>], iteration_bounds = array<i64: 1>, scalar_prefetch = 0 : i64, scratch_operands = 0 : i64, tpu.core_type = #tpu.core_type<tc>, window_params = [{transform_indices = @transform_0, window_bounds = array<i64: 16, 256>}, {transform_indices = @transform_1, window_bounds = array<i64: 16, 256>}, {transform_indices = @transform_2, window_bounds = array<i64: 16, 256>}, {pipeline_mode = #tpu.pipeline_mode<synchronous>, transform_indices = @transform_3, window_bounds = array<i64: 256, 256>}, {pipeline_mode = #tpu.pipeline_mode<synchronous>, transform_indices = @transform_4, window_bounds = array<i64: 1, 256>}, {pipeline_mode = #tpu.pipeline_mode<synchronous>, transform_indices = @transform_5, window_bounds = array<i64: 256, 256>}, {pipeline_mode = #tpu.pipeline_mode<synchronous>, transform_indices = @transform_6, window_bounds = array<i64: 1, 256>}, {pipeline_mode = #tpu.pipeline_mode<synchronous>, transform_indices = @transform_7, window_bounds = array<i64: 256, 256>}, {pipeline_mode = #tpu.pipeline_mode<synchronous>, transform_indices = @transform_8, window_bounds = array<i64: 1, 256>}, {transform_indices = @transform_9, window_bounds = array<i64: 16, 256>}, {transform_indices = @transform_10, window_bounds = array<i64: 16, 256>}, {transform_indices = @transform_11, window_bounds = array<i64: 16, 256>}]} {
    %c0 = arith.constant 0 : index
    %c0_0 = arith.constant 0 : index
    %0 = vector.load %arg1[%c0, %c0_0] : memref<16x256xbf16, #tpu.memory_space<vmem>>, vector<16x256xbf16>
    %c0_1 = arith.constant 0 : index
    %c0_2 = arith.constant 0 : index
    %1 = vector.load %arg4[%c0_1, %c0_2] : memref<256x256xbf16, #tpu.memory_space<vmem>>, vector<256x256xbf16>
    %cst = arith.constant dense<0.000000e+00> : vector<16x256xf32>
    %2 = tpu.matmul %0, %1, %cst {dimension_numbers = #tpu.dot_dimension_numbers<[1], [0], [0], [1], [0, 0, 1, 1], [], []>} : vector<16x256xbf16>, vector<256x256xbf16>, vector<16x256xf32> -> vector<16x256xf32>
    %c0_3 = arith.constant 0 : index
    %c0_4 = arith.constant 0 : index
    %3 = vector.load %arg5[%c0_3, %c0_4] : memref<1x256xf32, #tpu.memory_space<vmem>>, vector<1x256xf32>
    %4 = vector.broadcast %3 : vector<1x256xf32> to vector<16x256xf32>
    %5 = arith.addf %2, %4 : vector<16x256xf32>
    %6 = arith.truncf %5 : vector<16x256xf32> to vector<16x256xbf16>
    %c0_5 = arith.constant 0 : index
    %c0_6 = arith.constant 0 : index
    %7 = vector.load %arg10[%c0_5, %c0_6] : memref<16x256xbf16, #tpu.memory_space<vmem>>, vector<16x256xbf16>
    tpu.vector_store %arg10[%c0_5, %c0_6], %6 {strides = array<i32>} : memref<16x256xbf16, #tpu.memory_space<vmem>>, vector<16x256xbf16>,
    %c0_7 = arith.constant 0 : index
    %c0_8 = arith.constant 0 : index
    %8 = vector.load %arg2[%c0_7, %c0_8] : memref<16x256xbf16, #tpu.memory_space<vmem>>, vector<16x256xbf16>
    %c0_9 = arith.constant 0 : index
    %c0_10 = arith.constant 0 : index
    %9 = vector.load %arg6[%c0_9, %c0_10] : memref<256x256xbf16, #tpu.memory_space<vmem>>, vector<256x256xbf16>
    %cst_11 = arith.constant dense<0.000000e+00> : vector<16x256xf32>
    %10 = tpu.matmul %8, %9, %cst_11 {dimension_numbers = #tpu.dot_dimension_numbers<[1], [0], [0], [1], [0, 0, 1, 1], [], []>} : vector<16x256xbf16>, vector<256x256xbf16>, vector<16x256xf32> -> vector<16x256xf32>
    %c0_12 = arith.constant 0 : index
    %c0_13 = arith.constant 0 : index
    %11 = vector.load %arg7[%c0_12, %c0_13] : memref<1x256xf32, #tpu.memory_space<vmem>>, vector<1x256xf32>
    %12 = vector.broadcast %11 : vector<1x256xf32> to vector<16x256xf32>
    %13 = arith.addf %10, %12 : vector<16x256xf32>
    %14 = arith.truncf %13 : vector<16x256xf32> to vector<16x256xbf16>
    %c0_14 = arith.constant 0 : index
    %c0_15 = arith.constant 0 : index
    %15 = vector.load %arg11[%c0_14, %c0_15] : memref<16x256xbf16, #tpu.memory_space<vmem>>, vector<16x256xbf16>
    tpu.vector_store %arg11[%c0_14, %c0_15], %14 {strides = array<i32>} : memref<16x256xbf16, #tpu.memory_space<vmem>>, vector<16x256xbf16>,
    %c0_16 = arith.constant 0 : index
    %c0_17 = arith.constant 0 : index
    %16 = vector.load %arg3[%c0_16, %c0_17] : memref<16x256xbf16, #tpu.memory_space<vmem>>, vector<16x256xbf16>
    %c0_18 = arith.constant 0 : index
    %c0_19 = arith.constant 0 : index
    %17 = vector.load %arg8[%c0_18, %c0_19] : memref<256x256xbf16, #tpu.memory_space<vmem>>, vector<256x256xbf16>
    %cst_20 = arith.constant dense<0.000000e+00> : vector<16x256xf32>
    %18 = tpu.matmul %16, %17, %cst_20 {dimension_numbers = #tpu.dot_dimension_numbers<[1], [0], [0], [1], [0, 0, 1, 1], [], []>} : vector<16x256xbf16>, vector<256x256xbf16>, vector<16x256xf32> -> vector<16x256xf32>
    %c0_21 = arith.constant 0 : index
    %c0_22 = arith.constant 0 : index
    %19 = vector.load %arg9[%c0_21, %c0_22] : memref<1x256xf32, #tpu.memory_space<vmem>>, vector<1x256xf32>
    %20 = vector.broadcast %19 : vector<1x256xf32> to vector<16x256xf32>
    %21 = arith.addf %18, %20 : vector<16x256xf32>
    %22 = arith.truncf %21 : vector<16x256xf32> to vector<16x256xbf16>
    %c0_23 = arith.constant 0 : index
    %c0_24 = arith.constant 0 : index
    %23 = vector.load %arg12[%c0_23, %c0_24] : memref<16x256xbf16, #tpu.memory_space<vmem>>, vector<16x256xbf16>
    tpu.vector_store %arg12[%c0_23, %c0_24], %22 {strides = array<i32>} : memref<16x256xbf16, #tpu.memory_space<vmem>>, vector<16x256xbf16>,
    return
  }
  func.func @transform_0(%arg0: i32) -> (i32, i32) {
    %c0_i32 = arith.constant 0 : i32
    %c0_i32_0 = arith.constant 0 : i32
    return %arg0, %c0_i32 : i32, i32
  }
  func.func @transform_1(%arg0: i32) -> (i32, i32) {
    %c0_i32 = arith.constant 0 : i32
    %c0_i32_0 = arith.constant 0 : i32
    return %arg0, %c0_i32 : i32, i32
  }
  func.func @transform_2(%arg0: i32) -> (i32, i32) {
    %c0_i32 = arith.constant 0 : i32
    %c0_i32_0 = arith.constant 0 : i32
    return %arg0, %c0_i32 : i32, i32
  }
  func.func @transform_3(%arg0: i32) -> (i32, i32) {
    %c0_i32 = arith.constant 0 : i32
    %c0_i32_0 = arith.constant 0 : i32
    %c0_i32_1 = arith.constant 0 : i32
    return %c0_i32, %c0_i32_0 : i32, i32
  }
  func.func @transform_4(%arg0: i32) -> (i32, i32) {
    %c0_i32 = arith.constant 0 : i32
    %c0_i32_0 = arith.constant 0 : i32
    %c0_i32_1 = arith.constant 0 : i32
    return %c0_i32, %c0_i32_0 : i32, i32
  }
  func.func @transform_5(%arg0: i32) -> (i32, i32) {
    %c0_i32 = arith.constant 0 : i32
    %c0_i32_0 = arith.constant 0 : i32
    %c0_i32_1 = arith.constant 0 : i32
    return %c0_i32, %c0_i32_0 : i32, i32
  }
  func.func @transform_6(%arg0: i32) -> (i32, i32) {
    %c0_i32 = arith.constant 0 : i32
    %c0_i32_0 = arith.constant 0 : i32
    %c0_i32_1 = arith.constant 0 : i32
    return %c0_i32, %c0_i32_0 : i32, i32
  }
  func.func @transform_7(%arg0: i32) -> (i32, i32) {
    %c0_i32 = arith.constant 0 : i32
    %c0_i32_0 = arith.constant 0 : i32
    %c0_i32_1 = arith.constant 0 : i32
    return %c0_i32, %c0_i32_0 : i32, i32
  }
  func.func @transform_8(%arg0: i32) -> (i32, i32) {
    %c0_i32 = arith.constant 0 : i32
    %c0_i32_0 = arith.constant 0 : i32
    %c0_i32_1 = arith.constant 0 : i32
    return %c0_i32, %c0_i32_0 : i32, i32
  }
  func.func @transform_9(%arg0: i32) -> (i32, i32) {
    %c0_i32 = arith.constant 0 : i32
    %c0_i32_0 = arith.constant 0 : i32
    return %arg0, %c0_i32 : i32, i32
  }
  func.func @transform_10(%arg0: i32) -> (i32, i32) {
    %c0_i32 = arith.constant 0 : i32
    %c0_i32_0 = arith.constant 0 : i32
    return %arg0, %c0_i32 : i32, i32
  }
  func.func @transform_11(%arg0: i32) -> (i32, i32) {
    %c0_i32 = arith.constant 0 : i32
    %c0_i32_0 = arith.constant 0 : i32
    return %arg0, %c0_i32 : i32, i32
  }
}

module attributes {stable_mosaic.version = 11 : i64} {
  func.func @_attn_kernel(%arg0: i32, %arg1: i32, %arg2: i32, %arg3: memref<1x8x128xbf16, #tpu.memory_space<vmem>>, %arg4: memref<1x8x128xbf16, #tpu.memory_space<vmem>>, %arg5: memref<1x8x128xbf16, #tpu.memory_space<vmem>>, %arg6: memref<1x1x8xf32, #tpu.memory_space<vmem>>, %arg7: memref<1x8x128xbf16, #tpu.memory_space<vmem>>, %arg8: memref<1x1x8x8xbf16, #tpu.memory_space<vmem>>) attributes {dimension_semantics = [#tpu.dimension_semantics<parallel>, #tpu.dimension_semantics<parallel>, #tpu.dimension_semantics<parallel>], iteration_bounds = array<i64: 2, 2, 1>, scalar_prefetch = 0 : i64, scratch_operands = 0 : i64, tpu.core_type = #tpu.core_type<tc>, window_params = [{transform_indices = @transform_0, window_bounds = array<i64: 1, 8, 128>}, {transform_indices = @transform_1, window_bounds = array<i64: 1, 8, 128>}, {transform_indices = @transform_2, window_bounds = array<i64: 1, 8, 128>}, {transform_indices = @transform_3, window_bounds = array<i64: 1, 1, 8>}, {transform_indices = @transform_4, window_bounds = array<i64: 1, 8, 128>}, {transform_indices = @transform_5, window_bounds = array<i64: 1, 1, 8, 8>}]} {
    %c0 = arith.constant 0 : index
    %c0_0 = arith.constant 0 : index
    %c0_1 = arith.constant 0 : index
    %0 = vector.load %arg3[%c0, %c0_0, %c0_1] : memref<1x8x128xbf16, #tpu.memory_space<vmem>>, vector<1x8x128xbf16>
    %1 = vector.shape_cast %0 : vector<1x8x128xbf16> to vector<8x128xbf16>
    %c0_2 = arith.constant 0 : index
    %c0_3 = arith.constant 0 : index
    %c0_4 = arith.constant 0 : index
    %2 = vector.load %arg4[%c0_2, %c0_3, %c0_4] : memref<1x8x128xbf16, #tpu.memory_space<vmem>>, vector<1x8x128xbf16>
    %3 = vector.shape_cast %2 : vector<1x8x128xbf16> to vector<8x128xbf16>
    %c0_5 = arith.constant 0 : index
    %c0_6 = arith.constant 0 : index
    %c0_7 = arith.constant 0 : index
    %4 = vector.load %arg5[%c0_5, %c0_6, %c0_7] : memref<1x8x128xbf16, #tpu.memory_space<vmem>>, vector<1x8x128xbf16>
    %5 = vector.shape_cast %4 : vector<1x8x128xbf16> to vector<8x128xbf16>
    %cst = arith.constant dense<0.000000e+00> : vector<8x8xf32>
    %6 = tpu.matmul %1, %3, %cst {dimension_numbers = #tpu.dot_dimension_numbers<[1], [1], [0], [0], [0, 0, 1, 0], [], []>} : vector<8x128xbf16>, vector<8x128xbf16>, vector<8x8xf32> -> vector<8x8xf32>
    %cst_8 = arith.constant 0.0883883461 : f32
    %7 = vector.broadcast %cst_8 : f32 to vector<8x8xf32>
    %8 = arith.mulf %6, %7 : vector<8x8xf32>
    %c0_9 = arith.constant 0 : index
    %c0_10 = arith.constant 0 : index
    %c0_11 = arith.constant 0 : index
    %9 = vector.load %arg6[%c0_9, %c0_10, %c0_11] : memref<1x1x8xf32, #tpu.memory_space<vmem>>, vector<1x1x8xf32>
    %10 = vector.shape_cast %9 : vector<1x1x8xf32> to vector<1x8xf32>
    %11 = vector.broadcast %10 : vector<1x8xf32> to vector<8x8xf32>
    %12 = arith.addf %8, %11 : vector<8x8xf32>
    %cst_12 = arith.constant dense<0xFF800000> : vector<8xf32>
    %13 = vector.multi_reduction <maximumf>, %12, %cst_12 [1] : vector<8x8xf32> to vector<8xf32>
    %14 = vector.shape_cast %13 : vector<8xf32> to vector<8x1xf32>
    %15 = vector.broadcast %14 : vector<8x1xf32> to vector<8x8xf32>
    %16 = arith.subf %12, %15 : vector<8x8xf32>
    %17 = math.exp %16 : vector<8x8xf32>
    %cst_13 = arith.constant dense<0.000000e+00> : vector<8xf32>
    %18 = vector.multi_reduction <add>, %17, %cst_13 [1] : vector<8x8xf32> to vector<8xf32>
    %19 = vector.shape_cast %18 : vector<8xf32> to vector<8x1xf32>
    %20 = tpu.reciprocal %19 {approx = true} : vector<8x1xf32> -> vector<8x1xf32>
    %21 = vector.broadcast %20 : vector<8x1xf32> to vector<8x8xf32>
    %22 = arith.mulf %17, %21 : vector<8x8xf32>
    %23 = arith.truncf %22 : vector<8x8xf32> to vector<8x8xbf16>
    %c0_14 = arith.constant 0 : index
    %c0_15 = arith.constant 0 : index
    %c0_16 = arith.constant 0 : index
    %c0_17 = arith.constant 0 : index
    %24 = vector.load %arg8[%c0_14, %c0_15, %c0_16, %c0_17] : memref<1x1x8x8xbf16, #tpu.memory_space<vmem>>, vector<1x1x8x8xbf16>
    %25 = vector.shape_cast %24 : vector<1x1x8x8xbf16> to vector<8x8xbf16>
    %26 = vector.shape_cast %23 : vector<8x8xbf16> to vector<1x1x8x8xbf16>
    tpu.vector_store %arg8[%c0_14, %c0_15, %c0_16, %c0_17], %26 {strides = array<i32>} : memref<1x1x8x8xbf16, #tpu.memory_space<vmem>>, vector<1x1x8x8xbf16>,
    %27 = arith.truncf %22 : vector<8x8xf32> to vector<8x8xbf16>
    %cst_18 = arith.constant dense<0.000000e+00> : vector<8x128xf32>
    %28 = tpu.matmul %27, %5, %cst_18 {dimension_numbers = #tpu.dot_dimension_numbers<[1], [0], [0], [1], [0, 0, 1, 1], [], []>} : vector<8x8xbf16>, vector<8x128xbf16>, vector<8x128xf32> -> vector<8x128xf32>
    %29 = arith.truncf %28 : vector<8x128xf32> to vector<8x128xbf16>
    %c0_19 = arith.constant 0 : index
    %c0_20 = arith.constant 0 : index
    %c0_21 = arith.constant 0 : index
    %30 = vector.load %arg7[%c0_19, %c0_20, %c0_21] : memref<1x8x128xbf16, #tpu.memory_space<vmem>>, vector<1x8x128xbf16>
    %31 = vector.shape_cast %30 : vector<1x8x128xbf16> to vector<8x128xbf16>
    %32 = vector.shape_cast %29 : vector<8x128xbf16> to vector<1x8x128xbf16>
    tpu.vector_store %arg7[%c0_19, %c0_20, %c0_21], %32 {strides = array<i32>} : memref<1x8x128xbf16, #tpu.memory_space<vmem>>, vector<1x8x128xbf16>,
    return
  }
  func.func @transform_0(%arg0: i32, %arg1: i32, %arg2: i32) -> (i32, i32, i32) {
    %c0_i32 = arith.constant 0 : i32
    return %arg0, %arg2, %arg1 : i32, i32, i32
  }
  func.func @transform_1(%arg0: i32, %arg1: i32, %arg2: i32) -> (i32, i32, i32) {
    %c0_i32 = arith.constant 0 : i32
    %c0_i32_0 = arith.constant 0 : i32
    return %arg0, %c0_i32, %arg1 : i32, i32, i32
  }
  func.func @transform_2(%arg0: i32, %arg1: i32, %arg2: i32) -> (i32, i32, i32) {
    %c0_i32 = arith.constant 0 : i32
    %c0_i32_0 = arith.constant 0 : i32
    return %arg0, %c0_i32, %arg1 : i32, i32, i32
  }
  func.func @transform_3(%arg0: i32, %arg1: i32, %arg2: i32) -> (i32, i32, i32) {
    %c0_i32 = arith.constant 0 : i32
    %c0_i32_0 = arith.constant 0 : i32
    %c0_i32_1 = arith.constant 0 : i32
    return %arg0, %c0_i32, %c0_i32_0 : i32, i32, i32
  }
  func.func @transform_4(%arg0: i32, %arg1: i32, %arg2: i32) -> (i32, i32, i32) {
    %c0_i32 = arith.constant 0 : i32
    return %arg0, %arg2, %arg1 : i32, i32, i32
  }
  func.func @transform_5(%arg0: i32, %arg1: i32, %arg2: i32) -> (i32, i32, i32, i32) {
    %c0_i32 = arith.constant 0 : i32
    %c0_i32_0 = arith.constant 0 : i32
    return %arg0, %arg1, %arg2, %c0_i32 : i32, i32, i32, i32
  }
}

module attributes {stable_mosaic.version = 11 : i64} {
  func.func @_linear_kernel(%arg0: i32, %arg1: memref<16x256xbf16, #tpu.memory_space<vmem>>, %arg2: memref<256x256xbf16, #tpu.memory_space<vmem>>, %arg3: memref<1x256xf32, #tpu.memory_space<vmem>>, %arg4: memref<16x256xf32, #tpu.memory_space<vmem>>) attributes {dimension_semantics = [#tpu.dimension_semantics<parallel>], iteration_bounds = array<i64: 1>, scalar_prefetch = 0 : i64, scratch_operands = 0 : i64, tpu.core_type = #tpu.core_type<tc>, window_params = [{transform_indices = @transform_0, window_bounds = array<i64: 16, 256>}, {pipeline_mode = #tpu.pipeline_mode<synchronous>, transform_indices = @transform_1, window_bounds = array<i64: 256, 256>}, {pipeline_mode = #tpu.pipeline_mode<synchronous>, transform_indices = @transform_2, window_bounds = array<i64: 1, 256>}, {transform_indices = @transform_3, window_bounds = array<i64: 16, 256>}]} {
    %c0 = arith.constant 0 : index
    %c0_0 = arith.constant 0 : index
    %0 = vector.load %arg1[%c0, %c0_0] : memref<16x256xbf16, #tpu.memory_space<vmem>>, vector<16x256xbf16>
    %c0_1 = arith.constant 0 : index
    %c0_2 = arith.constant 0 : index
    %1 = vector.load %arg2[%c0_1, %c0_2] : memref<256x256xbf16, #tpu.memory_space<vmem>>, vector<256x256xbf16>
    %cst = arith.constant dense<0.000000e+00> : vector<16x256xf32>
    %2 = tpu.matmul %0, %1, %cst {dimension_numbers = #tpu.dot_dimension_numbers<[1], [0], [0], [1], [0, 0, 1, 1], [], []>} : vector<16x256xbf16>, vector<256x256xbf16>, vector<16x256xf32> -> vector<16x256xf32>
    %c0_3 = arith.constant 0 : index
    %c0_4 = arith.constant 0 : index
    %3 = vector.load %arg3[%c0_3, %c0_4] : memref<1x256xf32, #tpu.memory_space<vmem>>, vector<1x256xf32>
    %4 = vector.broadcast %3 : vector<1x256xf32> to vector<16x256xf32>
    %5 = arith.addf %2, %4 : vector<16x256xf32>
    %c0_5 = arith.constant 0 : index
    %c0_6 = arith.constant 0 : index
    %6 = vector.load %arg4[%c0_5, %c0_6] : memref<16x256xf32, #tpu.memory_space<vmem>>, vector<16x256xf32>
    tpu.vector_store %arg4[%c0_5, %c0_6], %5 {strides = array<i32>} : memref<16x256xf32, #tpu.memory_space<vmem>>, vector<16x256xf32>,
    return
  }
  func.func @transform_0(%arg0: i32) -> (i32, i32) {
    %c0_i32 = arith.constant 0 : i32
    %c0_i32_0 = arith.constant 0 : i32
    return %arg0, %c0_i32 : i32, i32
  }
  func.func @transform_1(%arg0: i32) -> (i32, i32) {
    %c0_i32 = arith.constant 0 : i32
    %c0_i32_0 = arith.constant 0 : i32
    %c0_i32_1 = arith.constant 0 : i32
    return %c0_i32, %c0_i32_0 : i32, i32
  }
  func.func @transform_2(%arg0: i32) -> (i32, i32) {
    %c0_i32 = arith.constant 0 : i32
    %c0_i32_0 = arith.constant 0 : i32
    %c0_i32_1 = arith.constant 0 : i32
    return %c0_i32, %c0_i32_0 : i32, i32
  }
  func.func @transform_3(%arg0: i32) -> (i32, i32) {
    %c0_i32 = arith.constant 0 : i32
    %c0_i32_0 = arith.constant 0 : i32
    return %arg0, %c0_i32 : i32, i32
  }
}

</mosaic_0001>

<llo_original>
// kernel: multi_headed_attention.4
$region0: #{multi_headed_attention.4}
  #allocation0 [shape = 'u32[]', space=smem, size = 0x4, offset = 0x4, fixed_abs, tag = 'smem constant byte address 0x4 - core index']
  #allocation1 [shape = 'u32[144,128]{1,0:T(1,128)}', space=vmem, size = 0x12000, scoped, tag = 'internal scratch']
  %s0 = inlined_call_operand.vmem [shape: bf16[2,8,256], index: 0, kind: input, shape index: {}]
  %s1 = inlined_call_operand.vmem [shape: bf16[2,8,256], index: 1, kind: input, shape index: {}]
  %s2 = inlined_call_operand.vmem [shape: bf16[2,8,256], index: 2, kind: input, shape index: {}]
  %s3 = inlined_call_operand.vmem [shape: f32[2,1,8], index: 3, kind: input, shape index: {}]
  %s4 = inlined_call_operand.vmem [shape: bf16[2,8,256], index: 4, kind: output, shape index: {0}]
  %s5 = inlined_call_operand.hbm [shape: bf16[2,2,8,8], index: 5, kind: output, shape index: {1}]
  %6 = xla_tuple %s4, %s5
  %s7 = sld [smem:[#allocation0]]
  $region57: #{multi_headed_attention.4} parent=0
    _
  %s9 = ssub.s32 1, %s7
  %s10 = scalar_select 0, %s9, %s7
  $region1: #{multi_headed_attention.4} parent=0
    #allocation2 [shape = 'u8[4096]{0}', space=vmem, size = 0x1000, scoped, tag = 'output window, operand 1']
    #allocation3 [shape = 's32[2]{0}', space=sflag, size = 0x8, scoped, tag = 'scoped memory for multi_headed_attention.4']
    %11 = vsyncpa [#allocation3], 0
    %s12 = scalar_lea.sflag [#allocation3], 1
    %13 = vsyncpa %s12, 0
    loop: start=0, step=1, limit=6
    $region2: #{multi_headed_attention.4} parent=1 // loop_pre_header
      _
    $region3: #{multi_headed_attention.4} parent=1 // loop_header
      %s15 = sphi 0, %s19
      %p16 = scmp.ge.s32.totalorder %s15, 6
      %s22 = sphi 0, %s41
      %s23 = sphi 0, %s37
      %s24 = sphi 0, %s33
      %s25 = sphi 0, %s22
      %s26 = sphi 0, %s23
      %s27 = sphi 0, %s24
      %s28 = sphi 0, %s25
      %s29 = sphi 0, %s26
      %s30 = sphi 0, %s27
      %s48 = sphi 0, %s50
      %s51 = sphi 0, %s48
      %s52 = sphi 0, %s51
      %s68 = sphi 0, %s52
      %s76 = sphi 0, %s78
      %s79 = sphi 0, %s76
      %s80 = sphi 0, %s79
      %s96 = sphi 0, %s80
      %s104 = sphi 0, %s106
      %s107 = sphi 0, %s104
      %s108 = sphi 0, %s107
      %s124 = sphi 0, %s108
      %s130 = sphi 0, %s132
      %s133 = sphi 0, %s130
      %s134 = sphi 0, %s133
      %s150 = sphi 0, %s134
      %s160 = sphi 0, %s162
      %s163 = sphi 0, %s160
      %s164 = sphi 0, %s163
      %s180 = sphi 0, %s164
      %s190 = sphi 0, %s192
      %s193 = sphi 0, %s190
      %s194 = sphi 0, %s193
      %s210 = sphi 0, %s194
    $region4: #{multi_headed_attention.4} parent=1 // loop_header_branch
      %18 = sbr.rel (%p16) target = $region8
    $region5: #{multi_headed_attention.4} parent=1 // loop_body
      %s20 = ssub.s32 %s15, 1
      %s21 = ssub.s32 %s15, 2
      %s31 = sadd.s32 1, %s24
      %p32 = scmp.ge.s32.totalorder %s31, 1
      %s33 = scalar_select %p32, 0, %s31
      %s34 = sadd.s32 1, %s23
      %s35 = scalar_select %p32, %s34, %s23
      %p36 = scmp.ge.s32.totalorder %s35, 2
      %s37 = scalar_select %p36, 0, %s35
      %s38 = sadd.s32 1, %s22
      %s39 = scalar_select %p36, %s38, %s22
      %p40 = scmp.ge.s32.totalorder %s39, 2
      %s41 = scalar_select %p40, 0, %s39
      %s42 = ssub.s32 %s22, %s41
      %s43 = ssub.s32 %s24, %s33
      %s44 = sor.u32 %s42, %s43
      %s45 = ssub.s32 %s23, %s37
      %s46 = sor.u32 %s44, %s45
      %p47 = scmp.eq.s32.totalorder %s46, 0
      %s49 = sadd.s32 %s48, 1
      %s50 = scalar_select %p47, %s48, %s49
      %p53 = pneg %p47
      %p54 = scmp.eq.s32.totalorder %s15, 3
      %p55 = por %p53, %p54
      %p56 = scmp.ne.s32.totalorder %s48, %s51
      %p57 = scmp.eq.s32.totalorder %s15, 0
      %p58 = por %p56, %p57
      %p59 = scmp.ne.s32.totalorder %s48, %s51
      %p60 = scmp.eq.s32.totalorder %s20, 3
      %p61 = por %p59, %p60
      %p62 = scmp.ne.s32.totalorder %s51, %s52
      %p63 = scmp.eq.s32.totalorder %s20, 0
      %p64 = por %p62, %p63
      %p65 = scmp.ne.s32.totalorder %s51, %s52
      %p66 = scmp.eq.s32.totalorder %s21, 3
      %p67 = por %p65, %p66
      %p69 = scmp.ne.s32.totalorder %s52, %s68
      %p70 = scmp.eq.s32.totalorder %s21, 0
      %p71 = por %p69, %p70
      %s72 = ssub.s32 %s22, %s41
      %s73 = ssub.s32 %s23, %s37
      %s74 = sor.u32 %s72, %s73
      %p75 = scmp.eq.s32.totalorder %s74, 0
      %s77 = sadd.s32 %s76, 1
      %s78 = scalar_select %p75, %s76, %s77
      %p81 = pneg %p75
      %p82 = scmp.eq.s32.totalorder %s15, 3
      %p83 = por %p81, %p82
      %p84 = scmp.ne.s32.totalorder %s76, %s79
      %p85 = scmp.eq.s32.totalorder %s15, 0
      %p86 = por %p84, %p85
      %p87 = scmp.ne.s32.totalorder %s76, %s79
      %p88 = scmp.eq.s32.totalorder %s20, 3
      %p89 = por %p87, %p88
      %p90 = scmp.ne.s32.totalorder %s79, %s80
      %p91 = scmp.eq.s32.totalorder %s20, 0
      %p92 = por %p90, %p91
      %p93 = scmp.ne.s32.totalorder %s79, %s80
      %p94 = scmp.eq.s32.totalorder %s21, 3
      %p95 = por %p93, %p94
      %p97 = scmp.ne.s32.totalorder %s80, %s96
      %p98 = scmp.eq.s32.totalorder %s21, 0
      %p99 = por %p97, %p98
      %s100 = ssub.s32 %s22, %s41
      %s101 = ssub.s32 %s23, %s37
      %s102 = sor.u32 %s100, %s101
      %p103 = scmp.eq.s32.totalorder %s102, 0
      %s105 = sadd.s32 %s104, 1
      %s106 = scalar_select %p103, %s104, %s105
      %p109 = pneg %p103
      %p110 = scmp.eq.s32.totalorder %s15, 3
      %p111 = por %p109, %p110
      %p112 = scmp.ne.s32.totalorder %s104, %s107
      %p113 = scmp.eq.s32.totalorder %s15, 0
      %p114 = por %p112, %p113
      %p115 = scmp.ne.s32.totalorder %s104, %s107
      %p116 = scmp.eq.s32.totalorder %s20, 3
      %p117 = por %p115, %p116
      %p118 = scmp.ne.s32.totalorder %s107, %s108
      %p119 = scmp.eq.s32.totalorder %s20, 0
      %p120 = por %p118, %p119
      %p121 = scmp.ne.s32.totalorder %s107, %s108
      %p122 = scmp.eq.s32.totalorder %s21, 3
      %p123 = por %p121, %p122
      %p125 = scmp.ne.s32.totalorder %s108, %s124
      %p126 = scmp.eq.s32.totalorder %s21, 0
      %p127 = por %p125, %p126
      %s128 = ssub.s32 %s22, %s41
      %p129 = scmp.eq.s32.totalorder %s128, 0
      %s131 = sadd.s32 %s130, 1
      %s132 = scalar_select %p129, %s130, %s131
      %p135 = pneg %p129
      %p136 = scmp.eq.s32.totalorder %s15, 3
      %p137 = por %p135, %p136
      %p138 = scmp.ne.s32.totalorder %s130, %s133
      %p139 = scmp.eq.s32.totalorder %s15, 0
      %p140 = por %p138, %p139
      %p141 = scmp.ne.s32.totalorder %s130, %s133
      %p142 = scmp.eq.s32.totalorder %s20, 3
      %p143 = por %p141, %p142
      %p144 = scmp.ne.s32.totalorder %s133, %s134
      %p145 = scmp.eq.s32.totalorder %s20, 0
      %p146 = por %p144, %p145
      %p147 = scmp.ne.s32.totalorder %s133, %s134
      %p148 = scmp.eq.s32.totalorder %s21, 3
      %p149 = por %p147, %p148
      %p151 = scmp.ne.s32.totalorder %s134, %s150
      %p152 = scmp.eq.s32.totalorder %s21, 0
      %p153 = por %p151, %p152
      %s154 = ssub.s32 %s22, %s41
      %s155 = ssub.s32 %s24, %s33
      %s156 = sor.u32 %s154, %s155
      %s157 = ssub.s32 %s23, %s37
      %s158 = sor.u32 %s156, %s157
      %p159 = scmp.eq.s32.totalorder %s158, 0
      %s161 = sadd.s32 %s160, 1
      %s162 = scalar_select %p159, %s160, %s161
      %p165 = pneg %p159
      %p166 = scmp.eq.s32.totalorder %s15, 3
      %p167 = por %p165, %p166
      %p168 = scmp.ne.s32.totalorder %s160, %s163
      %p169 = scmp.eq.s32.totalorder %s15, 0
      %p170 = por %p168, %p169
      %p171 = scmp.ne.s32.totalorder %s160, %s163
      %p172 = scmp.eq.s32.totalorder %s20, 3
      %p173 = por %p171, %p172
      %p174 = scmp.ne.s32.totalorder %s163, %s164
      %p175 = scmp.eq.s32.totalorder %s20, 0
      %p176 = por %p174, %p175
      %p177 = scmp.ne.s32.totalorder %s163, %s164
      %p178 = scmp.eq.s32.totalorder %s21, 3
      %p179 = por %p177, %p178
      %p181 = scmp.ne.s32.totalorder %s164, %s180
      %p182 = scmp.eq.s32.totalorder %s21, 0
      %p183 = por %p181, %p182
      %s184 = ssub.s32 %s22, %s41
      %s185 = ssub.s32 %s23, %s37
      %s186 = sor.u32 %s184, %s185
      %s187 = ssub.s32 %s24, %s33
      %s188 = sor.u32 %s186, %s187
      %p189 = scmp.eq.s32.totalorder %s188, 0
      %s191 = sadd.s32 %s190, 1
      %s192 = scalar_select %p189, %s190, %s191
      %p195 = pneg %p189
      %p196 = scmp.eq.s32.totalorder %s15, 3
      %p197 = por %p195, %p196
      %p198 = scmp.ne.s32.totalorder %s190, %s193
      %p199 = scmp.eq.s32.totalorder %s15, 0
      %p200 = por %p198, %p199
      %p201 = scmp.ne.s32.totalorder %s190, %s193
      %p202 = scmp.eq.s32.totalorder %s20, 3
      %p203 = por %p201, %p202
      %p204 = scmp.ne.s32.totalorder %s193, %s194
      %p205 = scmp.eq.s32.totalorder %s20, 0
      %p206 = por %p204, %p205
      %p207 = scmp.ne.s32.totalorder %s193, %s194
      %p208 = scmp.eq.s32.totalorder %s21, 3
      %p209 = por %p207, %p208
      %p211 = scmp.ne.s32.totalorder %s194, %s210
      %p212 = scmp.eq.s32.totalorder %s21, 0
      %p213 = por %p211, %p212
      %p214 = scmp.le.s32.totalorder 1, %s15
      %p215 = scmp.lt.s32.totalorder %s15, 5
      %p216 = pnand %p214, %p215
      %p217 = pneg %p216
      // Predicated region
      $region9: #{multi_headed_attention.4} parent=5 // pred_check
        _
      $region10: #{multi_headed_attention.4} parent=5 // pred_check_branch
        %219 = sbr.rel (%p216) target = $region12
      $region11: #{multi_headed_attention.4} parent=5 // pred_region
        %s220 = ssub.s32 %s15, 1
      $region12: #{multi_headed_attention.4} parent=5 // pred_fallthru
        _
      %p221 = scmp.lt.s32.totalorder %s15, 4
      // Predicated region
      $region13: #{multi_headed_attention.4} parent=5 // pred_check
        %p222 = pneg %p221
      $region14: #{multi_headed_attention.4} parent=5 // pred_check_branch
        %224 = sbr.rel (%p222) target = $region16
      $region15: #{multi_headed_attention.4} parent=5 // pred_region
        // Predicated region
        $region17: #{multi_headed_attention.4} parent=15 // pred_check
          %p225 = pneg %p58
        $region18: #{multi_headed_attention.4} parent=15 // pred_check_branch
          %227 = sbr.rel (%p225) target = $region20
        $region19: #{multi_headed_attention.4} parent=15 // pred_region
          %p228 = scmp.lt.s32.totalorder %s22, 1
          %s229 = scalar_select %p228, %s22, 1
          %p230 = scmp.lt.s32.totalorder %s24, 0
          %s231 = scalar_select %p230, %s24, 0
          %p232 = scmp.lt.s32.totalorder %s23, 1
          %s233 = scalar_select %p232, %s23, 1
          %s234 = smul.addr %s231, 2
          %s235 = sadd.s32 %s233, %s234
          %s236 = smul.addr %s229, 2
          %s237 = sadd.s32 %s235, %s236
          %s238 = smul.addr %s237, 4
          %s239 = scalar_lea.vmem %s0, %s238
        $region20: #{multi_headed_attention.4} parent=15 // pred_fallthru
          _
        // Predicated region
        $region21: #{multi_headed_attention.4} parent=15 // pred_check
          %p240 = pneg %p86
        $region22: #{multi_headed_attention.4} parent=15 // pred_check_branch
          %242 = sbr.rel (%p240) target = $region24
        $region23: #{multi_headed_attention.4} parent=15 // pred_region
          %p243 = scmp.lt.s32.totalorder %s22, 1
          %s244 = scalar_select %p243, %s22, 1
          %p245 = scmp.lt.s32.totalorder %s23, 1
          %s246 = scalar_select %p245, %s23, 1
          %s247 = smul.addr %s244, 2
          %s248 = sadd.s32 %s246, %s247
          %s249 = smul.addr %s248, 4
          %s250 = scalar_lea.vmem %s1, %s249
        $region24: #{multi_headed_attention.4} parent=15 // pred_fallthru
          _
        // Predicated region
        $region25: #{multi_headed_attention.4} parent=15 // pred_check
          %p251 = pneg %p114
        $region26: #{multi_headed_attention.4} parent=15 // pred_check_branch
          %253 = sbr.rel (%p251) target = $region28
        $region27: #{multi_headed_attention.4} parent=15 // pred_region
          %p254 = scmp.lt.s32.totalorder %s22, 1
          %s255 = scalar_select %p254, %s22, 1
          %p256 = scmp.lt.s32.totalorder %s23, 1
          %s257 = scalar_select %p256, %s23, 1
          %s258 = smul.addr %s255, 2
          %s259 = sadd.s32 %s257, %s258
          %s260 = smul.addr %s259, 4
          %s261 = scalar_lea.vmem %s2, %s260
        $region28: #{multi_headed_attention.4} parent=15 // pred_fallthru
          _
        // Predicated region
        $region29: #{multi_headed_attention.4} parent=15 // pred_check
          %p262 = pneg %p140
        $region30: #{multi_headed_attention.4} parent=15 // pred_check_branch
          %264 = sbr.rel (%p262) target = $region32
        $region31: #{multi_headed_attention.4} parent=15 // pred_region
          %p265 = scmp.lt.s32.totalorder %s22, 1
          %s266 = scalar_select %p265, %s22, 1
          %s267 = scalar_lea.vmem %s3, %s266
        $region32: #{multi_headed_attention.4} parent=15 // pred_fallthru
          _
      $region16: #{multi_headed_attention.4} parent=5 // pred_fallthru
        _
      %p268 = scmp.le.s32.totalorder 1, %s15
      %p269 = scmp.lt.s32.totalorder %s15, 5
      %p270 = pnand %p268, %p269
      %p271 = pneg %p270
      // Predicated region
      $region33: #{multi_headed_attention.4} parent=5 // pred_check
        _
      $region34: #{multi_headed_attention.4} parent=5 // pred_check_branch
        %273 = sbr.rel (%p270) target = $region36
      $region35: #{multi_headed_attention.4} parent=5 // pred_region
        %s274 = ssub.s32 %s15, 1
        %p275 = scmp.lt.s32.totalorder %s25, 1
        %s276 = scalar_select %p275, %s25, 1
        %p277 = scmp.lt.s32.totalorder %s27, 0
        %s278 = scalar_select %p277, %s27, 0
        %p279 = scmp.lt.s32.totalorder %s26, 1
        %s280 = scalar_select %p279, %s26, 1
        %s281 = smul.addr %s278, 2
        %s282 = sadd.s32 %s280, %s281
        %s283 = smul.addr %s276, 2
        %s284 = sadd.s32 %s282, %s283
        %s285 = smul.addr %s284, 4
        %s286 = scalar_lea.vmem %s0, %s285
        %p287 = pneg %p64
        %p288 = pneg %p61
        %p289 = scmp.lt.s32.totalorder %s25, 1
        %s290 = scalar_select %p289, %s25, 1
        %p291 = scmp.lt.s32.totalorder %s26, 1
        %s292 = scalar_select %p291, %s26, 1
        %s293 = smul.addr %s290, 2
        %s294 = sadd.s32 %s292, %s293
        %s295 = smul.addr %s294, 4
        %s296 = scalar_lea.vmem %s1, %s295
        %p297 = pneg %p92
        %p298 = pneg %p89
        %p299 = scmp.lt.s32.totalorder %s25, 1
        %s300 = scalar_select %p299, %s25, 1
        %p301 = scmp.lt.s32.totalorder %s26, 1
        %s302 = scalar_select %p301, %s26, 1
        %s303 = smul.addr %s300, 2
        %s304 = sadd.s32 %s302, %s303
        %s305 = smul.addr %s304, 4
        %s306 = scalar_lea.vmem %s2, %s305
        %p307 = pneg %p120
        %p308 = pneg %p117
        %p309 = scmp.lt.s32.totalorder %s25, 1
        %s310 = scalar_select %p309, %s25, 1
        %s311 = scalar_lea.vmem %s3, %s310
        %p312 = pneg %p146
        %p313 = pneg %p143
        %p314 = pneg %p176
        %p315 = pneg %p173
        %p316 = scmp.lt.s32.totalorder %s25, 1
        %s317 = scalar_select %p316, %s25, 1
        %p318 = scmp.lt.s32.totalorder %s27, 0
        %s319 = scalar_select %p318, %s27, 0
        %p320 = scmp.lt.s32.totalorder %s26, 1
        %s321 = scalar_select %p320, %s26, 1
        %s322 = smul.addr %s319, 2
        %s323 = sadd.s32 %s321, %s322
        %s324 = smul.addr %s317, 2
        %s325 = sadd.s32 %s323, %s324
        %s326 = smul.addr %s325, 4
        %s327 = scalar_lea.vmem %s4, %s326
        %p328 = pneg %p206
        %p329 = pneg %p203
        %s330 = sand.u32 %s193, 1
        %s331 = scalar_lea.sflag [#allocation3], %s330
        %s332 = sand.u32 %s193, 1
        %s333 = smul.addr %s332, 4
        %s334 = scalar_lea.vmem [#allocation2], %s333
        %p335 = scmp.lt.s32.totalorder %s25, 1
        %s336 = scalar_select %p335, %s25, 1
        %p337 = scmp.lt.s32.totalorder %s27, 0
        %s338 = scalar_select %p337, %s27, 0
        %p339 = scmp.lt.s32.totalorder %s26, 1
        %s340 = scalar_select %p339, %s26, 1
        %s341 = smul.addr %s338, 2
        %s342 = sadd.s32 %s340, %s341
        %s343 = smul.addr %s336, 2
        %s344 = sadd.s32 %s342, %s343
        %s345 = smul.addr %s344, 4
        %s346 = scalar_lea.vmem %s0, %s345
        %p347 = scmp.lt.s32.totalorder %s25, 1
        %s348 = scalar_select %p347, %s25, 1
        %p349 = scmp.lt.s32.totalorder %s26, 1
        %s350 = scalar_select %p349, %s26, 1
        %s351 = smul.addr %s348, 2
        %s352 = sadd.s32 %s350, %s351
        %s353 = smul.addr %s352, 4
        %s354 = scalar_lea.vmem %s1, %s353
        %p355 = scmp.lt.s32.totalorder %s25, 1
        %s356 = scalar_select %p355, %s25, 1
        %p357 = scmp.lt.s32.totalorder %s26, 1
        %s358 = scalar_select %p357, %s26, 1
        %s359 = smul.addr %s356, 2
        %s360 = sadd.s32 %s358, %s359
        %s361 = smul.addr %s360, 4
        %s362 = scalar_lea.vmem %s2, %s361
        %p363 = scmp.lt.s32.totalorder %s25, 1
        %s364 = scalar_select %p363, %s25, 1
        %s365 = scalar_lea.vmem %s3, %s364
        %p366 = scmp.lt.s32.totalorder %s25, 1
        %s367 = scalar_select %p366, %s25, 1
        %p368 = scmp.lt.s32.totalorder %s27, 0
        %s369 = scalar_select %p368, %s27, 0
        %p370 = scmp.lt.s32.totalorder %s26, 1
        %s371 = scalar_select %p370, %s26, 1
        %s372 = smul.addr %s369, 2
        %s373 = sadd.s32 %s371, %s372
        %s374 = smul.addr %s367, 2
        %s375 = sadd.s32 %s373, %s374
        %s376 = smul.addr %s375, 4
        %s377 = scalar_lea.vmem %s4, %s376
        %v379 = vld [vmem:[%s346] sm:$0xf]
        %v380 = vld [vmem:[%s354] sm:$0xf]
        %v381 = vld [vmem:[%s362] sm:$0xf]
        %382 = vmatprep.subr.bf16.mxu0 0
        %383 = vmatpush1.bf16.xpose.msra.mxu0 %v380
        %384 = vmatprep.subr.bf16.mxu0 0
        %385 = vmatpush1.bf16.xpose.msra.mxu0 0
        %386 = vmatprep.subr.bf16.mxu0 0
        %387 = vmatpush1.bf16.xpose.msra.mxu0 0
        %388 = vmatprep.subr.bf16.mxu0 0
        %389 = vmatpush1.bf16.xpose.msra.mxu0 0
        %390 = vmatprep.subr.bf16.mxu0 0
        %391 = vmatpush1.bf16.xpose.msra.mxu0 0
        %392 = vmatprep.subr.bf16.mxu0 0
        %393 = vmatpush1.bf16.xpose.msra.mxu0 0
        %394 = vmatprep.subr.bf16.mxu0 0
        %395 = vmatpush1.bf16.xpose.msra.mxu0 0
        %396 = vmatprep.subr.bf16.mxu0 0
        %397 = vmatpush1.bf16.xpose.msra.mxu0 0
        %398 = vmatprep.subr.bf16.mxu0 0
        %399 = vmatpush1.bf16.xpose.msra.mxu0 0
        %400 = vmatprep.subr.bf16.mxu0 0
        %401 = vmatpush1.bf16.xpose.msra.mxu0 0
        %402 = vmatprep.subr.bf16.mxu0 0
        %403 = vmatpush1.bf16.xpose.msra.mxu0 0
        %404 = vmatprep.subr.bf16.mxu0 0
        %405 = vmatpush1.bf16.xpose.msra.mxu0 0
        %406 = vmatprep.subr.bf16.mxu0 0
        %407 = vmatpush1.bf16.xpose.msra.mxu0 0
        %408 = vmatprep.subr.bf16.mxu0 0
        %409 = vmatpush1.bf16.xpose.msra.mxu0 0
        %410 = vmatprep.subr.bf16.mxu0 0
        %411 = vmatpush1.bf16.xpose.msra.mxu0 0
        %412 = vmatprep.subr.bf16.mxu0 0
        %413 = vmatpush1.bf16.xpose.msra.mxu0 0
        %414 = vmatprep.mubr.bf16.mxu0 0
        %415 = vmatmul.mubr.bf16.gmra.mrb[0].mxu0 %v379
        %v416 = vpop.f32.mrb[0].mxu0
        %v417 = vadd.f32 0.0, %v416
        %v418 = vpop.f32.mrb[0].mxu0
        %v419 = vpop.f32.mrb[0].mxu0
        %v420 = vpop.f32.mrb[0].mxu0
        %421 = vdwg.mxu0
        %v422 = vmul.f32 %v417, 0.088388346
        %v423 = vld [vmem:[%s365] sm:$0x1]
        %v425 = vlaneseq
        %v426 = vshrl.u32 %v425, 7
        %v427 = vsub.s32 0, %v426
        %v428 = vrot.slane %v423, %v427
        %v430 = vadd.f32 %v422, %v428
        %vm431 = vcmask 64512
        %v432 = vsel %vm431, %v430, -inf
        %433 = vmax.xlane.f32.xlu0 %v432
        %v434 = vpop.xlane.xlu0 %433
        %v435 = vsub.f32 %v430, %v434
        %v436 = vmul.f32 %v435, 1.442695
        %v437 = vpow.pop %v436
        %v438 = vsel %vm431, %v437, 0.0
        %439 = vadd.xlane.f32.xlu0 %v438
        %v440 = vpop.xlane.xlu0 %439
        %v441 = vrcp.pop %v440
        %v442 = vmul.f32 %v437, %v441
        %v443 = vpack.c.bf16 %v442, %v442
        %vm444 = vcmask 60416
        %445 = vst.msk [vmem:[%s334] sm:$0xf] %vm444, %v443
        %v447 = vsel %vm431, %v443, 0
        %vm449 = vcmask 1043456
        %v451 = vsel %vm449, %v381, 0
        %453 = vmatprep.subr.bf16.mxu0 0
        %454 = vmatpush1.bf16.msra.mxu0 %v451
        %455 = vmatprep.subr.bf16.mxu0 0
        %456 = vmatpush1.bf16.msra.mxu0 0
        %457 = vmatprep.subr.bf16.mxu0 0
        %458 = vmatpush1.bf16.msra.mxu0 0
        %459 = vmatprep.subr.bf16.mxu0 0
        %460 = vmatpush1.bf16.msra.mxu0 0
        %461 = vmatprep.subr.bf16.mxu0 0
        %462 = vmatpush1.bf16.msra.mxu0 0
        %463 = vmatprep.subr.bf16.mxu0 0
        %464 = vmatpush1.bf16.msra.mxu0 0
        %465 = vmatprep.subr.bf16.mxu0 0
        %466 = vmatpush1.bf16.msra.mxu0 0
        %467 = vmatprep.subr.bf16.mxu0 0
        %468 = vmatpush1.bf16.msra.mxu0 0
        %469 = vmatprep.subr.bf16.mxu0 0
        %470 = vmatpush1.bf16.msra.mxu0 0
        %471 = vmatprep.subr.bf16.mxu0 0
        %472 = vmatpush1.bf16.msra.mxu0 0
        %473 = vmatprep.subr.bf16.mxu0 0
        %474 = vmatpush1.bf16.msra.mxu0 0
        %475 = vmatprep.subr.bf16.mxu0 0
        %476 = vmatpush1.bf16.msra.mxu0 0
        %477 = vmatprep.subr.bf16.mxu0 0
        %478 = vmatpush1.bf16.msra.mxu0 0
        %479 = vmatprep.subr.bf16.mxu0 0
        %480 = vmatpush1.bf16.msra.mxu0 0
        %481 = vmatprep.subr.bf16.mxu0 0
        %482 = vmatpush1.bf16.msra.mxu0 0
        %483 = vmatprep.subr.bf16.mxu0 0
        %484 = vmatpush1.bf16.msra.mxu0 0
        %485 = vmatprep.mubr.bf16.mxu0 0
        %486 = vmatmul.mubr.bf16.gmra.mrb[0].mxu0 %v447
        %v487 = vpop.f32.mrb[0].mxu0
        %v488 = vadd.f32 0.0, %v487
        %v489 = vpop.f32.mrb[0].mxu0
        %v490 = vpop.f32.mrb[0].mxu0
        %v491 = vpop.f32.mrb[0].mxu0
        %492 = vdwg.mxu0
        %v493 = vpack.c.bf16 %v488, %v488
        %494 = vst [vmem:[%s377] sm:$0xf] %v493
        %p495 = scmp.lt.s32.totalorder %s25, 1
        %s496 = scalar_select %p495, %s25, 1
        %p497 = scmp.lt.s32.totalorder %s27, 0
        %s498 = scalar_select %p497, %s27, 0
        %p499 = scmp.lt.s32.totalorder %s26, 1
        %s500 = scalar_select %p499, %s26, 1
        %s501 = smul.addr %s498, 2
        %s502 = sadd.s32 %s500, %s501
        %s503 = smul.addr %s496, 2
        %s504 = sadd.s32 %s502, %s503
        %s505 = smul.addr %s504, 4
        %s506 = scalar_lea.vmem %s4, %s505
        %s507 = sand.u32 %s193, 1
        %s508 = scalar_lea.sflag [#allocation3], %s507
        %s509 = sand.u32 %s193, 1
        %s510 = smul.addr %s509, 4
        %s511 = scalar_lea.vmem [#allocation2], %s510
        // Predicated region
        $region37: #{multi_headed_attention.4} parent=35 // pred_check
          %p512 = pneg %p173
        $region38: #{multi_headed_attention.4} parent=35 // pred_check_branch
          %514 = sbr.rel (%p512) target = $region40
        $region39: #{multi_headed_attention.4} parent=35 // pred_region
          _
        $region40: #{multi_headed_attention.4} parent=35 // pred_fallthru
          _
        // Predicated region
        $region41: #{multi_headed_attention.4} parent=35 // pred_check
          %p515 = pneg %p203
        $region42: #{multi_headed_attention.4} parent=35 // pred_check_branch
          %517 = sbr.rel (%p515) target = $region44
        $region43: #{multi_headed_attention.4} parent=35 // pred_region
          %s519 = ssub.s32 64, 64
          %520 = vsyncadd %s508, %s519
          %s521 = sadd.s32 %s27, %s26
          %s522 = smul.addr %s25, 2
          %s523 = sadd.s32 %s521, %s522
          %s524 = smul.addr %s523, 64
          %s525 = scalar_lea.hbm %s5, %s524
          %s527 = sshll.u32 %s511, 4
          %s528 = int_to_ptr.vmem [resolvable:$true] %s527
          %530 = dma.vmem_to_hbm [thread:$0]  %s528, 64, %s525, %s508
        $region44: #{multi_headed_attention.4} parent=35 // pred_fallthru
          _
      $region36: #{multi_headed_attention.4} parent=5 // pred_fallthru
        _
      %p531 = scmp.le.s32.totalorder 2, %s15
      // Predicated region
      $region45: #{multi_headed_attention.4} parent=5 // pred_check
        %p532 = pneg %p531
      $region46: #{multi_headed_attention.4} parent=5 // pred_check_branch
        %534 = sbr.rel (%p532) target = $region48
      $region47: #{multi_headed_attention.4} parent=5 // pred_region
        %s535 = ssub.s32 %s15, 2
        // Predicated region
        $region49: #{multi_headed_attention.4} parent=47 // pred_check
          %p536 = pneg %p179
        $region50: #{multi_headed_attention.4} parent=47 // pred_check_branch
          %538 = sbr.rel (%p536) target = $region52
        $region51: #{multi_headed_attention.4} parent=47 // pred_region
          %p539 = scmp.lt.s32.totalorder %s28, 1
          %s540 = scalar_select %p539, %s28, 1
          %p541 = scmp.lt.s32.totalorder %s30, 0
          %s542 = scalar_select %p541, %s30, 0
          %p543 = scmp.lt.s32.totalorder %s29, 1
          %s544 = scalar_select %p543, %s29, 1
          %s545 = smul.addr %s542, 2
          %s546 = sadd.s32 %s544, %s545
          %s547 = smul.addr %s540, 2
          %s548 = sadd.s32 %s546, %s547
          %s549 = smul.addr %s548, 4
          %s550 = scalar_lea.vmem %s4, %s549
        $region52: #{multi_headed_attention.4} parent=47 // pred_fallthru
          _
        // Predicated region
        $region53: #{multi_headed_attention.4} parent=47 // pred_check
          %p551 = pneg %p209
        $region54: #{multi_headed_attention.4} parent=47 // pred_check_branch
          %553 = sbr.rel (%p551) target = $region56
        $region55: #{multi_headed_attention.4} parent=47 // pred_region
          %s554 = sand.u32 %s194, 1
          %s555 = scalar_lea.sflag [#allocation3], %s554
          %s556 = sand.u32 %s194, 1
          %s557 = smul.addr %s556, 4
          %s558 = scalar_lea.vmem [#allocation2], %s557
          %559 = dma.done %s555, 64
        $region56: #{multi_headed_attention.4} parent=47 // pred_fallthru
          _
      $region48: #{multi_headed_attention.4} parent=5 // pred_fallthru
        _
    $region6: #{multi_headed_attention.4} parent=1 // loop_footer
      %s19 = sadd.s32 1, %s15
    $region7: #{multi_headed_attention.4} parent=1 // loop_footer_branch
      %14 = sbr.rel target = $region3
    $region8: #{multi_headed_attention.4} parent=1 // loop_exit
      _
    %560 = vsyncpa [#allocation3], 1
    %s561 = scalar_lea.sflag [#allocation3], 1
    %562 = vsyncpa %s561, 1

// kernel: multi_headed_attention.5
$region0: #{multi_headed_attention.5}
  #allocation0 [shape = 'u32[]', space=smem, size = 0x4, offset = 0x4, fixed_abs, tag = 'smem constant byte address 0x4 - core index']
  #allocation1 [shape = 'u32[144,128]{1,0:T(1,128)}', space=vmem, size = 0x12000, scoped, tag = 'internal scratch']
  %s0 = inlined_call_operand.vmem [shape: bf16[16,256], index: 0, kind: input, shape index: {}]
  %s1 = inlined_call_operand.vmem [shape: bf16[256,256], index: 1, kind: input, shape index: {}]
  %s2 = inlined_call_operand.vmem [shape: f32[1,256], index: 2, kind: input, shape index: {}]
  %s3 = inlined_call_operand.hbm [shape: f32[16,256], index: 3, kind: output, shape index: {}]
  %s4 = sld [smem:[#allocation0]]
  $region22: #{multi_headed_attention.5} parent=0
    _
  %s6 = ssub.s32 1, %s4
  %s7 = scalar_select 0, %s6, %s4
  $region1: #{multi_headed_attention.5} parent=0
    #allocation2 [shape = 'u8[16384]{0}', space=vmem, size = 0x4000, scoped, tag = 'output window, operand 0, single buffered']
    #allocation3 [shape = 's32[1]{0}', space=sflag, size = 0x4, scoped, tag = 'scoped memory for multi_headed_attention.5']
    %8 = vsyncpa [#allocation3], 0
    // Predicated region
    $region2: #{multi_headed_attention.5} parent=1 // pred_check
      _
    $region3: #{multi_headed_attention.5} parent=1 // pred_check_branch
      %10 = sbr.rel (0) target = $region5
    $region4: #{multi_headed_attention.5} parent=1 // pred_region
      _
    $region5: #{multi_headed_attention.5} parent=1 // pred_fallthru
      _
    // Predicated region
    $region6: #{multi_headed_attention.5} parent=1 // pred_check
      _
    $region7: #{multi_headed_attention.5} parent=1 // pred_check_branch
      %12 = sbr.rel (0) target = $region9
    $region8: #{multi_headed_attention.5} parent=1 // pred_region
      _
    $region9: #{multi_headed_attention.5} parent=1 // pred_fallthru
      _
    // Predicated region
    $region10: #{multi_headed_attention.5} parent=1 // pred_check
      _
    $region11: #{multi_headed_attention.5} parent=1 // pred_check_branch
      %14 = sbr.rel (0) target = $region13
    $region12: #{multi_headed_attention.5} parent=1 // pred_region
      _
    $region13: #{multi_headed_attention.5} parent=1 // pred_fallthru
      _
    %v15 = vld [vmem:[%s0] sm:$0xff]
    %v16 = vld [vmem:[%s0 + $0x8] sm:$0xff]
    %v17 = vld [vmem:[%s1] sm:$0xff]
    %v18 = vld [vmem:[%s1 + $0x8] sm:$0xff]
    %v19 = vld [vmem:[%s1 + $0x10] sm:$0xff]
    %v20 = vld [vmem:[%s1 + $0x18] sm:$0xff]
    %v21 = vld [vmem:[%s1 + $0x20] sm:$0xff]
    %v22 = vld [vmem:[%s1 + $0x28] sm:$0xff]
    %v23 = vld [vmem:[%s1 + $0x30] sm:$0xff]
    %v24 = vld [vmem:[%s1 + $0x38] sm:$0xff]
    %v25 = vld [vmem:[%s1 + $0x40] sm:$0xff]
    %v26 = vld [vmem:[%s1 + $0x48] sm:$0xff]
    %v27 = vld [vmem:[%s1 + $0x50] sm:$0xff]
    %v28 = vld [vmem:[%s1 + $0x58] sm:$0xff]
    %v29 = vld [vmem:[%s1 + $0x60] sm:$0xff]
    %v30 = vld [vmem:[%s1 + $0x68] sm:$0xff]
    %v31 = vld [vmem:[%s1 + $0x70] sm:$0xff]
    %v32 = vld [vmem:[%s1 + $0x78] sm:$0xff]
    %v33 = vld [vmem:[%s1 + $0x80] sm:$0xff]
    %v34 = vld [vmem:[%s1 + $0x88] sm:$0xff]
    %v35 = vld [vmem:[%s1 + $0x90] sm:$0xff]
    %v36 = vld [vmem:[%s1 + $0x98] sm:$0xff]
    %v37 = vld [vmem:[%s1 + $0xa0] sm:$0xff]
    %v38 = vld [vmem:[%s1 + $0xa8] sm:$0xff]
    %v39 = vld [vmem:[%s1 + $0xb0] sm:$0xff]
    %v40 = vld [vmem:[%s1 + $0xb8] sm:$0xff]
    %v41 = vld [vmem:[%s1 + $0xc0] sm:$0xff]
    %v42 = vld [vmem:[%s1 + $0xc8] sm:$0xff]
    %v43 = vld [vmem:[%s1 + $0xd0] sm:$0xff]
    %v44 = vld [vmem:[%s1 + $0xd8] sm:$0xff]
    %v45 = vld [vmem:[%s1 + $0xe0] sm:$0xff]
    %v46 = vld [vmem:[%s1 + $0xe8] sm:$0xff]
    %v47 = vld [vmem:[%s1 + $0xf0] sm:$0xff]
    %v48 = vld [vmem:[%s1 + $0xf8] sm:$0xff]
    %v49 = vld [vmem:[%s2] sm:$0x3]
    %v51 = vlaneseq
    %v52 = vshrl.u32 %v51, 7
    %v53 = vsub.s32 0, %v52
    %v54 = vrot.slane %v49, %v53
    %v55 = vlaneseq
    %v56 = vshrl.u32 %v55, 7
    %v57 = vsub.s32 1, %v56
    %v58 = vrot.slane %v49, %v57
    %v63 = vunpack.c.l.b16 %v15
    %v64 = vunpack.c.h.b16 %v15
    %v65 = vunpack.c.l.b16 %v16
    %v66 = vunpack.c.h.b16 %v16
    %v67 = vpack.c.b16 %v65, %v63
    %v68 = vpack.c.b16 %v66, %v64
    %v103 = vunpack.c.l.b16 %v17
    %v104 = vunpack.c.h.b16 %v17
    %v105 = vunpack.c.l.b16 %v18
    %v106 = vunpack.c.h.b16 %v18
    %v107 = vunpack.c.l.b16 %v19
    %v108 = vunpack.c.h.b16 %v19
    %v109 = vunpack.c.l.b16 %v20
    %v110 = vunpack.c.h.b16 %v20
    %v111 = vunpack.c.l.b16 %v21
    %v112 = vunpack.c.h.b16 %v21
    %v113 = vunpack.c.l.b16 %v22
    %v114 = vunpack.c.h.b16 %v22
    %v115 = vunpack.c.l.b16 %v23
    %v116 = vunpack.c.h.b16 %v23
    %v117 = vunpack.c.l.b16 %v24
    %v118 = vunpack.c.h.b16 %v24
    %v119 = vunpack.c.l.b16 %v25
    %v120 = vunpack.c.h.b16 %v25
    %v121 = vunpack.c.l.b16 %v26
    %v122 = vunpack.c.h.b16 %v26
    %v123 = vunpack.c.l.b16 %v27
    %v124 = vunpack.c.h.b16 %v27
    %v125 = vunpack.c.l.b16 %v28
    %v126 = vunpack.c.h.b16 %v28
    %v127 = vunpack.c.l.b16 %v29
    %v128 = vunpack.c.h.b16 %v29
    %v129 = vunpack.c.l.b16 %v30
    %v130 = vunpack.c.h.b16 %v30
    %v131 = vunpack.c.l.b16 %v31
    %v132 = vunpack.c.h.b16 %v31
    %v133 = vunpack.c.l.b16 %v32
    %v134 = vunpack.c.h.b16 %v32
    %v135 = vunpack.c.l.b16 %v33
    %v136 = vunpack.c.h.b16 %v33
    %v137 = vunpack.c.l.b16 %v34
    %v138 = vunpack.c.h.b16 %v34
    %v139 = vunpack.c.l.b16 %v35
    %v140 = vunpack.c.h.b16 %v35
    %v141 = vunpack.c.l.b16 %v36
    %v142 = vunpack.c.h.b16 %v36
    %v143 = vunpack.c.l.b16 %v37
    %v144 = vunpack.c.h.b16 %v37
    %v145 = vunpack.c.l.b16 %v38
    %v146 = vunpack.c.h.b16 %v38
    %v147 = vunpack.c.l.b16 %v39
    %v148 = vunpack.c.h.b16 %v39
    %v149 = vunpack.c.l.b16 %v40
    %v150 = vunpack.c.h.b16 %v40
    %v151 = vunpack.c.l.b16 %v41
    %v152 = vunpack.c.h.b16 %v41
    %v153 = vunpack.c.l.b16 %v42
    %v154 = vunpack.c.h.b16 %v42
    %v155 = vunpack.c.l.b16 %v43
    %v156 = vunpack.c.h.b16 %v43
    %v157 = vunpack.c.l.b16 %v44
    %v158 = vunpack.c.h.b16 %v44
    %v159 = vunpack.c.l.b16 %v45
    %v160 = vunpack.c.h.b16 %v45
    %v161 = vunpack.c.l.b16 %v46
    %v162 = vunpack.c.h.b16 %v46
    %v163 = vunpack.c.l.b16 %v47
    %v164 = vunpack.c.h.b16 %v47
    %v165 = vunpack.c.l.b16 %v48
    %v166 = vunpack.c.h.b16 %v48
    %v167 = vpack.c.b16 %v105, %v103
    %v168 = vpack.c.b16 %v106, %v104
    %v169 = vpack.c.b16 %v109, %v107
    %v170 = vpack.c.b16 %v110, %v108
    %v171 = vpack.c.b16 %v113, %v111
    %v172 = vpack.c.b16 %v114, %v112
    %v173 = vpack.c.b16 %v117, %v115
    %v174 = vpack.c.b16 %v118, %v116
    %v175 = vpack.c.b16 %v121, %v119
    %v176 = vpack.c.b16 %v122, %v120
    %v177 = vpack.c.b16 %v125, %v123
    %v178 = vpack.c.b16 %v126, %v124
    %v179 = vpack.c.b16 %v129, %v127
    %v180 = vpack.c.b16 %v130, %v128
    %v181 = vpack.c.b16 %v133, %v131
    %v182 = vpack.c.b16 %v134, %v132
    %v183 = vpack.c.b16 %v137, %v135
    %v184 = vpack.c.b16 %v138, %v136
    %v185 = vpack.c.b16 %v141, %v139
    %v186 = vpack.c.b16 %v142, %v140
    %v187 = vpack.c.b16 %v145, %v143
    %v188 = vpack.c.b16 %v146, %v144
    %v189 = vpack.c.b16 %v149, %v147
    %v190 = vpack.c.b16 %v150, %v148
    %v191 = vpack.c.b16 %v153, %v151
    %v192 = vpack.c.b16 %v154, %v152
    %v193 = vpack.c.b16 %v157, %v155
    %v194 = vpack.c.b16 %v158, %v156
    %v195 = vpack.c.b16 %v161, %v159
    %v196 = vpack.c.b16 %v162, %v160
    %v197 = vpack.c.b16 %v165, %v163
    %v198 = vpack.c.b16 %v166, %v164
    %231 = vmatprep.subr.bf16.mxu0 %v168
    %232 = vmatpush1.bf16.msra.mxu0 %v167
    %233 = vmatprep.subr.bf16.mxu0 %v170
    %234 = vmatpush1.bf16.msra.mxu0 %v169
    %235 = vmatprep.subr.bf16.mxu0 %v172
    %236 = vmatpush1.bf16.msra.mxu0 %v171
    %237 = vmatprep.subr.bf16.mxu0 %v174
    %238 = vmatpush1.bf16.msra.mxu0 %v173
    %239 = vmatprep.subr.bf16.mxu0 %v176
    %240 = vmatpush1.bf16.msra.mxu0 %v175
    %241 = vmatprep.subr.bf16.mxu0 %v178
    %242 = vmatpush1.bf16.msra.mxu0 %v177
    %243 = vmatprep.subr.bf16.mxu0 %v180
    %244 = vmatpush1.bf16.msra.mxu0 %v179
    %245 = vmatprep.subr.bf16.mxu0 %v182
    %246 = vmatpush1.bf16.msra.mxu0 %v181
    %247 = vmatprep.subr.bf16.mxu0 %v184
    %248 = vmatpush1.bf16.msra.mxu0 %v183
    %249 = vmatprep.subr.bf16.mxu0 %v186
    %250 = vmatpush1.bf16.msra.mxu0 %v185
    %251 = vmatprep.subr.bf16.mxu0 %v188
    %252 = vmatpush1.bf16.msra.mxu0 %v187
    %253 = vmatprep.subr.bf16.mxu0 %v190
    %254 = vmatpush1.bf16.msra.mxu0 %v189
    %255 = vmatprep.subr.bf16.mxu0 %v192
    %256 = vmatpush1.bf16.msra.mxu0 %v191
    %257 = vmatprep.subr.bf16.mxu0 %v194
    %258 = vmatpush1.bf16.msra.mxu0 %v193
    %259 = vmatprep.subr.bf16.mxu0 %v196
    %260 = vmatpush1.bf16.msra.mxu0 %v195
    %261 = vmatprep.subr.bf16.mxu0 %v198
    %262 = vmatpush1.bf16.msra.mxu0 %v197
    %263 = vmatprep.mubr.bf16.mxu0 %v68
    %264 = vmatmul.mubr.bf16.gmra.mrb[0].mxu0 %v67
    %v265 = vpop.f32.mrb[0].mxu0
    %v266 = vadd.f32 %v54, %v265
    %v267 = vpop.f32.mrb[0].mxu0
    %v268 = vadd.f32 %v58, %v267
    %v269 = vpop.f32.mrb[0].mxu0
    %v270 = vadd.f32 %v54, %v269
    %v271 = vpop.f32.mrb[0].mxu0
    %v272 = vadd.f32 %v58, %v271
    %273 = vdwg.mxu0
    %274 = vst [vmem:[#allocation2] sm:$0xff] %v266
    %275 = vst [vmem:[#allocation2 + $0x8] sm:$0xff] %v268
    %276 = vst [vmem:[#allocation2 + $0x10] sm:$0xff] %v270
    %277 = vst [vmem:[#allocation2 + $0x18] sm:$0xff] %v272
    // Predicated region
    $region14: #{multi_headed_attention.5} parent=1 // pred_check
      _
    $region15: #{multi_headed_attention.5} parent=1 // pred_check_branch
      %279 = sbr.rel (0) target = $region17
    $region16: #{multi_headed_attention.5} parent=1 // pred_region
      %s281 = ssub.s32 512, 512
      %282 = vsyncadd [#allocation3], %s281
      %s283 = sshll.u32 [#allocation2], 4
      %s284 = int_to_ptr.vmem [resolvable:$true] %s283
      %289 = dma.vmem_to_hbm [thread:$0]  %s284, 512, %s3, [#allocation3], 256, 256, 16
    $region17: #{multi_headed_attention.5} parent=1 // pred_fallthru
      _
    // Predicated region
    $region18: #{multi_headed_attention.5} parent=1 // pred_check
      _
    $region19: #{multi_headed_attention.5} parent=1 // pred_check_branch
      %291 = sbr.rel (0) target = $region21
    $region20: #{multi_headed_attention.5} parent=1 // pred_region
      %292 = dma.done [#allocation3], 512
    $region21: #{multi_headed_attention.5} parent=1 // pred_fallthru
      _
    %293 = vsyncpa [#allocation3], 1

// kernel: multi_headed_attention.3
$region0: #{multi_headed_attention.3}
  #allocation0 [shape = 'u32[]', space=smem, size = 0x4, offset = 0x4, fixed_abs, tag = 'smem constant byte address 0x4 - core index']
  #allocation1 [shape = 'u32[144,128]{1,0:T(1,128)}', space=vmem, size = 0x12000, scoped, tag = 'internal scratch']
  %s0 = inlined_call_operand.vmem [shape: bf16[16,256], index: 0, kind: input, shape index: {}]
  %s1 = inlined_call_operand.vmem [shape: bf16[16,256], index: 1, kind: input, shape index: {}]
  %s2 = inlined_call_operand.vmem [shape: bf16[16,256], index: 2, kind: input, shape index: {}]
  %s3 = inlined_call_operand.vmem [shape: bf16[256,256], index: 3, kind: input, shape index: {}]
  %s4 = inlined_call_operand.vmem [shape: f32[1,256], index: 4, kind: input, shape index: {}]
  %s5 = inlined_call_operand.vmem [shape: bf16[256,256], index: 5, kind: input, shape index: {}]
  %s6 = inlined_call_operand.vmem [shape: f32[1,256], index: 6, kind: input, shape index: {}]
  %s7 = inlined_call_operand.vmem [shape: bf16[256,256], index: 7, kind: input, shape index: {}]
  %s8 = inlined_call_operand.vmem [shape: f32[1,256], index: 8, kind: input, shape index: {}]
  %s9 = inlined_call_operand.vmem [shape: bf16[16,256], index: 9, kind: output, shape index: {0}]
  %s10 = inlined_call_operand.vmem [shape: bf16[16,256], index: 10, kind: output, shape index: {1}]
  %s11 = inlined_call_operand.vmem [shape: bf16[16,256], index: 11, kind: output, shape index: {2}]
  %12 = xla_tuple %s9, %s10, %s11
  %s13 = sld [smem:[#allocation0]]
  $region62: #{multi_headed_attention.3} parent=0
    _
  %s15 = ssub.s32 1, %s13
  %s16 = scalar_select 0, %s15, %s13
  // Predicated region
  $region2: #{multi_headed_attention.3} parent=0 // pred_check
    _
  $region3: #{multi_headed_attention.3} parent=0 // pred_check_branch
    %18 = sbr.rel (0) target = $region5
  $region4: #{multi_headed_attention.3} parent=0 // pred_region
    _
  $region5: #{multi_headed_attention.3} parent=0 // pred_fallthru
    _
  // Predicated region
  $region6: #{multi_headed_attention.3} parent=0 // pred_check
    _
  $region7: #{multi_headed_attention.3} parent=0 // pred_check_branch
    %20 = sbr.rel (0) target = $region9
  $region8: #{multi_headed_attention.3} parent=0 // pred_region
    _
  $region9: #{multi_headed_attention.3} parent=0 // pred_fallthru
    _
  // Predicated region
  $region10: #{multi_headed_attention.3} parent=0 // pred_check
    _
  $region11: #{multi_headed_attention.3} parent=0 // pred_check_branch
    %22 = sbr.rel (0) target = $region13
  $region12: #{multi_headed_attention.3} parent=0 // pred_region
    _
  $region13: #{multi_headed_attention.3} parent=0 // pred_fallthru
    _
  // Predicated region
  $region14: #{multi_headed_attention.3} parent=0 // pred_check
    _
  $region15: #{multi_headed_attention.3} parent=0 // pred_check_branch
    %24 = sbr.rel (0) target = $region17
  $region16: #{multi_headed_attention.3} parent=0 // pred_region
    _
  $region17: #{multi_headed_attention.3} parent=0 // pred_fallthru
    _
  // Predicated region
  $region18: #{multi_headed_attention.3} parent=0 // pred_check
    _
  $region19: #{multi_headed_attention.3} parent=0 // pred_check_branch
    %26 = sbr.rel (0) target = $region21
  $region20: #{multi_headed_attention.3} parent=0 // pred_region
    _
  $region21: #{multi_headed_attention.3} parent=0 // pred_fallthru
    _
  // Predicated region
  $region22: #{multi_headed_attention.3} parent=0 // pred_check
    _
  $region23: #{multi_headed_attention.3} parent=0 // pred_check_branch
    %28 = sbr.rel (0) target = $region25
  $region24: #{multi_headed_attention.3} parent=0 // pred_region
    _
  $region25: #{multi_headed_attention.3} parent=0 // pred_fallthru
    _
  // Predicated region
  $region26: #{multi_headed_attention.3} parent=0 // pred_check
    _
  $region27: #{multi_headed_attention.3} parent=0 // pred_check_branch
    %30 = sbr.rel (0) target = $region29
  $region28: #{multi_headed_attention.3} parent=0 // pred_region
    _
  $region29: #{multi_headed_attention.3} parent=0 // pred_fallthru
    _
  // Predicated region
  $region30: #{multi_headed_attention.3} parent=0 // pred_check
    _
  $region31: #{multi_headed_attention.3} parent=0 // pred_check_branch
    %32 = sbr.rel (0) target = $region33
  $region32: #{multi_headed_attention.3} parent=0 // pred_region
    _
  $region33: #{multi_headed_attention.3} parent=0 // pred_fallthru
    _
  // Predicated region
  $region34: #{multi_headed_attention.3} parent=0 // pred_check
    _
  $region35: #{multi_headed_attention.3} parent=0 // pred_check_branch
    %34 = sbr.rel (0) target = $region37
  $region36: #{multi_headed_attention.3} parent=0 // pred_region
    _
  $region37: #{multi_headed_attention.3} parent=0 // pred_fallthru
    _
  %v35 = vld [vmem:[%s0] sm:$0xff]
  %v36 = vld [vmem:[%s0 + $0x8] sm:$0xff]
  %v37 = vld [vmem:[%s3] sm:$0xff]
  %v38 = vld [vmem:[%s3 + $0x8] sm:$0xff]
  %v39 = vld [vmem:[%s3 + $0x10] sm:$0xff]
  %v40 = vld [vmem:[%s3 + $0x18] sm:$0xff]
  %v41 = vld [vmem:[%s3 + $0x20] sm:$0xff]
  %v42 = vld [vmem:[%s3 + $0x28] sm:$0xff]
  %v43 = vld [vmem:[%s3 + $0x30] sm:$0xff]
  %v44 = vld [vmem:[%s3 + $0x38] sm:$0xff]
  %v45 = vld [vmem:[%s3 + $0x40] sm:$0xff]
  %v46 = vld [vmem:[%s3 + $0x48] sm:$0xff]
  %v47 = vld [vmem:[%s3 + $0x50] sm:$0xff]
  %v48 = vld [vmem:[%s3 + $0x58] sm:$0xff]
  %v49 = vld [vmem:[%s3 + $0x60] sm:$0xff]
  %v50 = vld [vmem:[%s3 + $0x68] sm:$0xff]
  %v51 = vld [vmem:[%s3 + $0x70] sm:$0xff]
  %v52 = vld [vmem:[%s3 + $0x78] sm:$0xff]
  %v53 = vld [vmem:[%s3 + $0x80] sm:$0xff]
  %v54 = vld [vmem:[%s3 + $0x88] sm:$0xff]
  %v55 = vld [vmem:[%s3 + $0x90] sm:$0xff]
  %v56 = vld [vmem:[%s3 + $0x98] sm:$0xff]
  %v57 = vld [vmem:[%s3 + $0xa0] sm:$0xff]
  %v58 = vld [vmem:[%s3 + $0xa8] sm:$0xff]
  %v59 = vld [vmem:[%s3 + $0xb0] sm:$0xff]
  %v60 = vld [vmem:[%s3 + $0xb8] sm:$0xff]
  %v61 = vld [vmem:[%s3 + $0xc0] sm:$0xff]
  %v62 = vld [vmem:[%s3 + $0xc8] sm:$0xff]
  %v63 = vld [vmem:[%s3 + $0xd0] sm:$0xff]
  %v64 = vld [vmem:[%s3 + $0xd8] sm:$0xff]
  %v65 = vld [vmem:[%s3 + $0xe0] sm:$0xff]
  %v66 = vld [vmem:[%s3 + $0xe8] sm:$0xff]
  %v67 = vld [vmem:[%s3 + $0xf0] sm:$0xff]
  %v68 = vld [vmem:[%s3 + $0xf8] sm:$0xff]
  %v69 = vld [vmem:[%s4] sm:$0x3]
  %v71 = vlaneseq
  %v72 = vshrl.u32 %v71, 7
  %v73 = vsub.s32 0, %v72
  %v74 = vrot.slane %v69, %v73
  %v75 = vlaneseq
  %v76 = vshrl.u32 %v75, 7
  %v77 = vsub.s32 1, %v76
  %v78 = vrot.slane %v69, %v77
  %v83 = vunpack.c.l.b16 %v35
  %v84 = vunpack.c.h.b16 %v35
  %v85 = vunpack.c.l.b16 %v36
  %v86 = vunpack.c.h.b16 %v36
  %v87 = vpack.c.b16 %v85, %v83
  %v88 = vpack.c.b16 %v86, %v84
  %v123 = vunpack.c.l.b16 %v37
  %v124 = vunpack.c.h.b16 %v37
  %v125 = vunpack.c.l.b16 %v38
  %v126 = vunpack.c.h.b16 %v38
  %v127 = vunpack.c.l.b16 %v39
  %v128 = vunpack.c.h.b16 %v39
  %v129 = vunpack.c.l.b16 %v40
  %v130 = vunpack.c.h.b16 %v40
  %v131 = vunpack.c.l.b16 %v41
  %v132 = vunpack.c.h.b16 %v41
  %v133 = vunpack.c.l.b16 %v42
  %v134 = vunpack.c.h.b16 %v42
  %v135 = vunpack.c.l.b16 %v43
  %v136 = vunpack.c.h.b16 %v43
  %v137 = vunpack.c.l.b16 %v44
  %v138 = vunpack.c.h.b16 %v44
  %v139 = vunpack.c.l.b16 %v45
  %v140 = vunpack.c.h.b16 %v45
  %v141 = vunpack.c.l.b16 %v46
  %v142 = vunpack.c.h.b16 %v46
  %v143 = vunpack.c.l.b16 %v47
  %v144 = vunpack.c.h.b16 %v47
  %v145 = vunpack.c.l.b16 %v48
  %v146 = vunpack.c.h.b16 %v48
  %v147 = vunpack.c.l.b16 %v49
  %v148 = vunpack.c.h.b16 %v49
  %v149 = vunpack.c.l.b16 %v50
  %v150 = vunpack.c.h.b16 %v50
  %v151 = vunpack.c.l.b16 %v51
  %v152 = vunpack.c.h.b16 %v51
  %v153 = vunpack.c.l.b16 %v52
  %v154 = vunpack.c.h.b16 %v52
  %v155 = vunpack.c.l.b16 %v53
  %v156 = vunpack.c.h.b16 %v53
  %v157 = vunpack.c.l.b16 %v54
  %v158 = vunpack.c.h.b16 %v54
  %v159 = vunpack.c.l.b16 %v55
  %v160 = vunpack.c.h.b16 %v55
  %v161 = vunpack.c.l.b16 %v56
  %v162 = vunpack.c.h.b16 %v56
  %v163 = vunpack.c.l.b16 %v57
  %v164 = vunpack.c.h.b16 %v57
  %v165 = vunpack.c.l.b16 %v58
  %v166 = vunpack.c.h.b16 %v58
  %v167 = vunpack.c.l.b16 %v59
  %v168 = vunpack.c.h.b16 %v59
  %v169 = vunpack.c.l.b16 %v60
  %v170 = vunpack.c.h.b16 %v60
  %v171 = vunpack.c.l.b16 %v61
  %v172 = vunpack.c.h.b16 %v61
  %v173 = vunpack.c.l.b16 %v62
  %v174 = vunpack.c.h.b16 %v62
  %v175 = vunpack.c.l.b16 %v63
  %v176 = vunpack.c.h.b16 %v63
  %v177 = vunpack.c.l.b16 %v64
  %v178 = vunpack.c.h.b16 %v64
  %v179 = vunpack.c.l.b16 %v65
  %v180 = vunpack.c.h.b16 %v65
  %v181 = vunpack.c.l.b16 %v66
  %v182 = vunpack.c.h.b16 %v66
  %v183 = vunpack.c.l.b16 %v67
  %v184 = vunpack.c.h.b16 %v67
  %v185 = vunpack.c.l.b16 %v68
  %v186 = vunpack.c.h.b16 %v68
  %v187 = vpack.c.b16 %v125, %v123
  %v188 = vpack.c.b16 %v126, %v124
  %v189 = vpack.c.b16 %v129, %v127
  %v190 = vpack.c.b16 %v130, %v128
  %v191 = vpack.c.b16 %v133, %v131
  %v192 = vpack.c.b16 %v134, %v132
  %v193 = vpack.c.b16 %v137, %v135
  %v194 = vpack.c.b16 %v138, %v136
  %v195 = vpack.c.b16 %v141, %v139
  %v196 = vpack.c.b16 %v142, %v140
  %v197 = vpack.c.b16 %v145, %v143
  %v198 = vpack.c.b16 %v146, %v144
  %v199 = vpack.c.b16 %v149, %v147
  %v200 = vpack.c.b16 %v150, %v148
  %v201 = vpack.c.b16 %v153, %v151
  %v202 = vpack.c.b16 %v154, %v152
  %v203 = vpack.c.b16 %v157, %v155
  %v204 = vpack.c.b16 %v158, %v156
  %v205 = vpack.c.b16 %v161, %v159
  %v206 = vpack.c.b16 %v162, %v160
  %v207 = vpack.c.b16 %v165, %v163
  %v208 = vpack.c.b16 %v166, %v164
  %v209 = vpack.c.b16 %v169, %v167
  %v210 = vpack.c.b16 %v170, %v168
  %v211 = vpack.c.b16 %v173, %v171
  %v212 = vpack.c.b16 %v174, %v172
  %v213 = vpack.c.b16 %v177, %v175
  %v214 = vpack.c.b16 %v178, %v176
  %v215 = vpack.c.b16 %v181, %v179
  %v216 = vpack.c.b16 %v182, %v180
  %v217 = vpack.c.b16 %v185, %v183
  %v218 = vpack.c.b16 %v186, %v184
  %251 = vmatprep.subr.bf16.mxu0 %v188
  %252 = vmatpush1.bf16.msra.mxu0 %v187
  %253 = vmatprep.subr.bf16.mxu0 %v190
  %254 = vmatpush1.bf16.msra.mxu0 %v189
  %255 = vmatprep.subr.bf16.mxu0 %v192
  %256 = vmatpush1.bf16.msra.mxu0 %v191
  %257 = vmatprep.subr.bf16.mxu0 %v194
  %258 = vmatpush1.bf16.msra.mxu0 %v193
  %259 = vmatprep.subr.bf16.mxu0 %v196
  %260 = vmatpush1.bf16.msra.mxu0 %v195
  %261 = vmatprep.subr.bf16.mxu0 %v198
  %262 = vmatpush1.bf16.msra.mxu0 %v197
  %263 = vmatprep.subr.bf16.mxu0 %v200
  %264 = vmatpush1.bf16.msra.mxu0 %v199
  %265 = vmatprep.subr.bf16.mxu0 %v202
  %266 = vmatpush1.bf16.msra.mxu0 %v201
  %267 = vmatprep.subr.bf16.mxu0 %v204
  %268 = vmatpush1.bf16.msra.mxu0 %v203
  %269 = vmatprep.subr.bf16.mxu0 %v206
  %270 = vmatpush1.bf16.msra.mxu0 %v205
  %271 = vmatprep.subr.bf16.mxu0 %v208
  %272 = vmatpush1.bf16.msra.mxu0 %v207
  %273 = vmatprep.subr.bf16.mxu0 %v210
  %274 = vmatpush1.bf16.msra.mxu0 %v209
  %275 = vmatprep.subr.bf16.mxu0 %v212
  %276 = vmatpush1.bf16.msra.mxu0 %v211
  %277 = vmatprep.subr.bf16.mxu0 %v214
  %278 = vmatpush1.bf16.msra.mxu0 %v213
  %279 = vmatprep.subr.bf16.mxu0 %v216
  %280 = vmatpush1.bf16.msra.mxu0 %v215
  %281 = vmatprep.subr.bf16.mxu0 %v218
  %282 = vmatpush1.bf16.msra.mxu0 %v217
  %283 = vmatprep.mubr.bf16.mxu0 %v88
  %284 = vmatmul.mubr.bf16.gmra.mrb[0].mxu0 %v87
  %v285 = vpop.f32.mrb[0].mxu0
  %v286 = vadd.f32 %v74, %v285
  %v287 = vpop.f32.mrb[0].mxu0
  %v288 = vadd.f32 %v78, %v287
  %v289 = vpop.f32.mrb[0].mxu0
  %v290 = vadd.f32 %v74, %v289
  %v291 = vpop.f32.mrb[0].mxu0
  %v292 = vadd.f32 %v78, %v291
  %293 = vdwg.mxu0
  %v294 = vpack.c.bf16 %v290, %v286
  %v295 = vpack.c.bf16 %v292, %v288
  %v298 = vunpack.c.l.b16 %v294
  %v299 = vunpack.c.l.b16 %v295
  %v300 = vunpack.c.h.b16 %v294
  %v301 = vunpack.c.h.b16 %v295
  %v302 = vpack.c.b16 %v299, %v298
  %v303 = vpack.c.b16 %v301, %v300
  %306 = vst [vmem:[%s9] sm:$0xff] %v302
  %307 = vst [vmem:[%s9 + $0x8] sm:$0xff] %v303
  %v308 = vld [vmem:[%s1] sm:$0xff]
  %v309 = vld [vmem:[%s1 + $0x8] sm:$0xff]
  %v310 = vld [vmem:[%s5] sm:$0xff]
  %v311 = vld [vmem:[%s5 + $0x8] sm:$0xff]
  %v312 = vld [vmem:[%s5 + $0x10] sm:$0xff]
  %v313 = vld [vmem:[%s5 + $0x18] sm:$0xff]
  %v314 = vld [vmem:[%s5 + $0x20] sm:$0xff]
  %v315 = vld [vmem:[%s5 + $0x28] sm:$0xff]
  %v316 = vld [vmem:[%s5 + $0x30] sm:$0xff]
  %v317 = vld [vmem:[%s5 + $0x38] sm:$0xff]
  %v318 = vld [vmem:[%s5 + $0x40] sm:$0xff]
  %v319 = vld [vmem:[%s5 + $0x48] sm:$0xff]
  %v320 = vld [vmem:[%s5 + $0x50] sm:$0xff]
  %v321 = vld [vmem:[%s5 + $0x58] sm:$0xff]
  %v322 = vld [vmem:[%s5 + $0x60] sm:$0xff]
  %v323 = vld [vmem:[%s5 + $0x68] sm:$0xff]
  %v324 = vld [vmem:[%s5 + $0x70] sm:$0xff]
  %v325 = vld [vmem:[%s5 + $0x78] sm:$0xff]
  %v326 = vld [vmem:[%s5 + $0x80] sm:$0xff]
  %v327 = vld [vmem:[%s5 + $0x88] sm:$0xff]
  %v328 = vld [vmem:[%s5 + $0x90] sm:$0xff]
  %v329 = vld [vmem:[%s5 + $0x98] sm:$0xff]
  %v330 = vld [vmem:[%s5 + $0xa0] sm:$0xff]
  %v331 = vld [vmem:[%s5 + $0xa8] sm:$0xff]
  %v332 = vld [vmem:[%s5 + $0xb0] sm:$0xff]
  %v333 = vld [vmem:[%s5 + $0xb8] sm:$0xff]
  %v334 = vld [vmem:[%s5 + $0xc0] sm:$0xff]
  %v335 = vld [vmem:[%s5 + $0xc8] sm:$0xff]
  %v336 = vld [vmem:[%s5 + $0xd0] sm:$0xff]
  %v337 = vld [vmem:[%s5 + $0xd8] sm:$0xff]
  %v338 = vld [vmem:[%s5 + $0xe0] sm:$0xff]
  %v339 = vld [vmem:[%s5 + $0xe8] sm:$0xff]
  %v340 = vld [vmem:[%s5 + $0xf0] sm:$0xff]
  %v341 = vld [vmem:[%s5 + $0xf8] sm:$0xff]
  %v342 = vld [vmem:[%s6] sm:$0x3]
  %v344 = vlaneseq
  %v345 = vshrl.u32 %v344, 7
  %v346 = vsub.s32 0, %v345
  %v347 = vrot.slane %v342, %v346
  %v348 = vlaneseq
  %v349 = vshrl.u32 %v348, 7
  %v350 = vsub.s32 1, %v349
  %v351 = vrot.slane %v342, %v350
  %v356 = vunpack.c.l.b16 %v308
  %v357 = vunpack.c.h.b16 %v308
  %v358 = vunpack.c.l.b16 %v309
  %v359 = vunpack.c.h.b16 %v309
  %v360 = vpack.c.b16 %v358, %v356
  %v361 = vpack.c.b16 %v359, %v357
  %v396 = vunpack.c.l.b16 %v310
  %v397 = vunpack.c.h.b16 %v310
  %v398 = vunpack.c.l.b16 %v311
  %v399 = vunpack.c.h.b16 %v311
  %v400 = vunpack.c.l.b16 %v312
  %v401 = vunpack.c.h.b16 %v312
  %v402 = vunpack.c.l.b16 %v313
  %v403 = vunpack.c.h.b16 %v313
  %v404 = vunpack.c.l.b16 %v314
  %v405 = vunpack.c.h.b16 %v314
  %v406 = vunpack.c.l.b16 %v315
  %v407 = vunpack.c.h.b16 %v315
  %v408 = vunpack.c.l.b16 %v316
  %v409 = vunpack.c.h.b16 %v316
  %v410 = vunpack.c.l.b16 %v317
  %v411 = vunpack.c.h.b16 %v317
  %v412 = vunpack.c.l.b16 %v318
  %v413 = vunpack.c.h.b16 %v318
  %v414 = vunpack.c.l.b16 %v319
  %v415 = vunpack.c.h.b16 %v319
  %v416 = vunpack.c.l.b16 %v320
  %v417 = vunpack.c.h.b16 %v320
  %v418 = vunpack.c.l.b16 %v321
  %v419 = vunpack.c.h.b16 %v321
  %v420 = vunpack.c.l.b16 %v322
  %v421 = vunpack.c.h.b16 %v322
  %v422 = vunpack.c.l.b16 %v323
  %v423 = vunpack.c.h.b16 %v323
  %v424 = vunpack.c.l.b16 %v324
  %v425 = vunpack.c.h.b16 %v324
  %v426 = vunpack.c.l.b16 %v325
  %v427 = vunpack.c.h.b16 %v325
  %v428 = vunpack.c.l.b16 %v326
  %v429 = vunpack.c.h.b16 %v326
  %v430 = vunpack.c.l.b16 %v327
  %v431 = vunpack.c.h.b16 %v327
  %v432 = vunpack.c.l.b16 %v328
  %v433 = vunpack.c.h.b16 %v328
  %v434 = vunpack.c.l.b16 %v329
  %v435 = vunpack.c.h.b16 %v329
  %v436 = vunpack.c.l.b16 %v330
  %v437 = vunpack.c.h.b16 %v330
  %v438 = vunpack.c.l.b16 %v331
  %v439 = vunpack.c.h.b16 %v331
  %v440 = vunpack.c.l.b16 %v332
  %v441 = vunpack.c.h.b16 %v332
  %v442 = vunpack.c.l.b16 %v333
  %v443 = vunpack.c.h.b16 %v333
  %v444 = vunpack.c.l.b16 %v334
  %v445 = vunpack.c.h.b16 %v334
  %v446 = vunpack.c.l.b16 %v335
  %v447 = vunpack.c.h.b16 %v335
  %v448 = vunpack.c.l.b16 %v336
  %v449 = vunpack.c.h.b16 %v336
  %v450 = vunpack.c.l.b16 %v337
  %v451 = vunpack.c.h.b16 %v337
  %v452 = vunpack.c.l.b16 %v338
  %v453 = vunpack.c.h.b16 %v338
  %v454 = vunpack.c.l.b16 %v339
  %v455 = vunpack.c.h.b16 %v339
  %v456 = vunpack.c.l.b16 %v340
  %v457 = vunpack.c.h.b16 %v340
  %v458 = vunpack.c.l.b16 %v341
  %v459 = vunpack.c.h.b16 %v341
  %v460 = vpack.c.b16 %v398, %v396
  %v461 = vpack.c.b16 %v399, %v397
  %v462 = vpack.c.b16 %v402, %v400
  %v463 = vpack.c.b16 %v403, %v401
  %v464 = vpack.c.b16 %v406, %v404
  %v465 = vpack.c.b16 %v407, %v405
  %v466 = vpack.c.b16 %v410, %v408
  %v467 = vpack.c.b16 %v411, %v409
  %v468 = vpack.c.b16 %v414, %v412
  %v469 = vpack.c.b16 %v415, %v413
  %v470 = vpack.c.b16 %v418, %v416
  %v471 = vpack.c.b16 %v419, %v417
  %v472 = vpack.c.b16 %v422, %v420
  %v473 = vpack.c.b16 %v423, %v421
  %v474 = vpack.c.b16 %v426, %v424
  %v475 = vpack.c.b16 %v427, %v425
  %v476 = vpack.c.b16 %v430, %v428
  %v477 = vpack.c.b16 %v431, %v429
  %v478 = vpack.c.b16 %v434, %v432
  %v479 = vpack.c.b16 %v435, %v433
  %v480 = vpack.c.b16 %v438, %v436
  %v481 = vpack.c.b16 %v439, %v437
  %v482 = vpack.c.b16 %v442, %v440
  %v483 = vpack.c.b16 %v443, %v441
  %v484 = vpack.c.b16 %v446, %v444
  %v485 = vpack.c.b16 %v447, %v445
  %v486 = vpack.c.b16 %v450, %v448
  %v487 = vpack.c.b16 %v451, %v449
  %v488 = vpack.c.b16 %v454, %v452
  %v489 = vpack.c.b16 %v455, %v453
  %v490 = vpack.c.b16 %v458, %v456
  %v491 = vpack.c.b16 %v459, %v457
  %524 = vmatprep.subr.bf16.mxu0 %v461
  %525 = vmatpush1.bf16.msra.mxu0 %v460
  %526 = vmatprep.subr.bf16.mxu0 %v463
  %527 = vmatpush1.bf16.msra.mxu0 %v462
  %528 = vmatprep.subr.bf16.mxu0 %v465
  %529 = vmatpush1.bf16.msra.mxu0 %v464
  %530 = vmatprep.subr.bf16.mxu0 %v467
  %531 = vmatpush1.bf16.msra.mxu0 %v466
  %532 = vmatprep.subr.bf16.mxu0 %v469
  %533 = vmatpush1.bf16.msra.mxu0 %v468
  %534 = vmatprep.subr.bf16.mxu0 %v471
  %535 = vmatpush1.bf16.msra.mxu0 %v470
  %536 = vmatprep.subr.bf16.mxu0 %v473
  %537 = vmatpush1.bf16.msra.mxu0 %v472
  %538 = vmatprep.subr.bf16.mxu0 %v475
  %539 = vmatpush1.bf16.msra.mxu0 %v474
  %540 = vmatprep.subr.bf16.mxu0 %v477
  %541 = vmatpush1.bf16.msra.mxu0 %v476
  %542 = vmatprep.subr.bf16.mxu0 %v479
  %543 = vmatpush1.bf16.msra.mxu0 %v478
  %544 = vmatprep.subr.bf16.mxu0 %v481
  %545 = vmatpush1.bf16.msra.mxu0 %v480
  %546 = vmatprep.subr.bf16.mxu0 %v483
  %547 = vmatpush1.bf16.msra.mxu0 %v482
  %548 = vmatprep.subr.bf16.mxu0 %v485
  %549 = vmatpush1.bf16.msra.mxu0 %v484
  %550 = vmatprep.subr.bf16.mxu0 %v487
  %551 = vmatpush1.bf16.msra.mxu0 %v486
  %552 = vmatprep.subr.bf16.mxu0 %v489
  %553 = vmatpush1.bf16.msra.mxu0 %v488
  %554 = vmatprep.subr.bf16.mxu0 %v491
  %555 = vmatpush1.bf16.msra.mxu0 %v490
  %556 = vmatprep.mubr.bf16.mxu0 %v361
  %557 = vmatmul.mubr.bf16.gmra.mrb[0].mxu0 %v360
  %v558 = vpop.f32.mrb[0].mxu0
  %v559 = vadd.f32 %v347, %v558
  %v560 = vpop.f32.mrb[0].mxu0
  %v561 = vadd.f32 %v351, %v560
  %v562 = vpop.f32.mrb[0].mxu0
  %v563 = vadd.f32 %v347, %v562
  %v564 = vpop.f32.mrb[0].mxu0
  %v565 = vadd.f32 %v351, %v564
  %566 = vdwg.mxu0
  %v567 = vpack.c.bf16 %v563, %v559
  %v568 = vpack.c.bf16 %v565, %v561
  %v571 = vunpack.c.l.b16 %v567
  %v572 = vunpack.c.l.b16 %v568
  %v573 = vunpack.c.h.b16 %v567
  %v574 = vunpack.c.h.b16 %v568
  %v575 = vpack.c.b16 %v572, %v571
  %v576 = vpack.c.b16 %v574, %v573
  %579 = vst [vmem:[%s10] sm:$0xff] %v575
  %580 = vst [vmem:[%s10 + $0x8] sm:$0xff] %v576
  %v581 = vld [vmem:[%s2] sm:$0xff]
  %v582 = vld [vmem:[%s2 + $0x8] sm:$0xff]
  %v583 = vld [vmem:[%s7] sm:$0xff]
  %v584 = vld [vmem:[%s7 + $0x8] sm:$0xff]
  %v585 = vld [vmem:[%s7 + $0x10] sm:$0xff]
  %v586 = vld [vmem:[%s7 + $0x18] sm:$0xff]
  %v587 = vld [vmem:[%s7 + $0x20] sm:$0xff]
  %v588 = vld [vmem:[%s7 + $0x28] sm:$0xff]
  %v589 = vld [vmem:[%s7 + $0x30] sm:$0xff]
  %v590 = vld [vmem:[%s7 + $0x38] sm:$0xff]
  %v591 = vld [vmem:[%s7 + $0x40] sm:$0xff]
  %v592 = vld [vmem:[%s7 + $0x48] sm:$0xff]
  %v593 = vld [vmem:[%s7 + $0x50] sm:$0xff]
  %v594 = vld [vmem:[%s7 + $0x58] sm:$0xff]
  %v595 = vld [vmem:[%s7 + $0x60] sm:$0xff]
  %v596 = vld [vmem:[%s7 + $0x68] sm:$0xff]
  %v597 = vld [vmem:[%s7 + $0x70] sm:$0xff]
  %v598 = vld [vmem:[%s7 + $0x78] sm:$0xff]
  %v599 = vld [vmem:[%s7 + $0x80] sm:$0xff]
  %v600 = vld [vmem:[%s7 + $0x88] sm:$0xff]
  %v601 = vld [vmem:[%s7 + $0x90] sm:$0xff]
  %v602 = vld [vmem:[%s7 + $0x98] sm:$0xff]
  %v603 = vld [vmem:[%s7 + $0xa0] sm:$0xff]
  %v604 = vld [vmem:[%s7 + $0xa8] sm:$0xff]
  %v605 = vld [vmem:[%s7 + $0xb0] sm:$0xff]
  %v606 = vld [vmem:[%s7 + $0xb8] sm:$0xff]
  %v607 = vld [vmem:[%s7 + $0xc0] sm:$0xff]
  %v608 = vld [vmem:[%s7 + $0xc8] sm:$0xff]
  %v609 = vld [vmem:[%s7 + $0xd0] sm:$0xff]
  %v610 = vld [vmem:[%s7 + $0xd8] sm:$0xff]
  %v611 = vld [vmem:[%s7 + $0xe0] sm:$0xff]
  %v612 = vld [vmem:[%s7 + $0xe8] sm:$0xff]
  %v613 = vld [vmem:[%s7 + $0xf0] sm:$0xff]
  %v614 = vld [vmem:[%s7 + $0xf8] sm:$0xff]
  %v615 = vld [vmem:[%s8] sm:$0x3]
  %v617 = vlaneseq
  %v618 = vshrl.u32 %v617, 7
  %v619 = vsub.s32 0, %v618
  %v620 = vrot.slane %v615, %v619
  %v621 = vlaneseq
  %v622 = vshrl.u32 %v621, 7
  %v623 = vsub.s32 1, %v622
  %v624 = vrot.slane %v615, %v623
  %v629 = vunpack.c.l.b16 %v581
  %v630 = vunpack.c.h.b16 %v581
  %v631 = vunpack.c.l.b16 %v582
  %v632 = vunpack.c.h.b16 %v582
  %v633 = vpack.c.b16 %v631, %v629
  %v634 = vpack.c.b16 %v632, %v630
  %v669 = vunpack.c.l.b16 %v583
  %v670 = vunpack.c.h.b16 %v583
  %v671 = vunpack.c.l.b16 %v584
  %v672 = vunpack.c.h.b16 %v584
  %v673 = vunpack.c.l.b16 %v585
  %v674 = vunpack.c.h.b16 %v585
  %v675 = vunpack.c.l.b16 %v586
  %v676 = vunpack.c.h.b16 %v586
  %v677 = vunpack.c.l.b16 %v587
  %v678 = vunpack.c.h.b16 %v587
  %v679 = vunpack.c.l.b16 %v588
  %v680 = vunpack.c.h.b16 %v588
  %v681 = vunpack.c.l.b16 %v589
  %v682 = vunpack.c.h.b16 %v589
  %v683 = vunpack.c.l.b16 %v590
  %v684 = vunpack.c.h.b16 %v590
  %v685 = vunpack.c.l.b16 %v591
  %v686 = vunpack.c.h.b16 %v591
  %v687 = vunpack.c.l.b16 %v592
  %v688 = vunpack.c.h.b16 %v592
  %v689 = vunpack.c.l.b16 %v593
  %v690 = vunpack.c.h.b16 %v593
  %v691 = vunpack.c.l.b16 %v594
  %v692 = vunpack.c.h.b16 %v594
  %v693 = vunpack.c.l.b16 %v595
  %v694 = vunpack.c.h.b16 %v595
  %v695 = vunpack.c.l.b16 %v596
  %v696 = vunpack.c.h.b16 %v596
  %v697 = vunpack.c.l.b16 %v597
  %v698 = vunpack.c.h.b16 %v597
  %v699 = vunpack.c.l.b16 %v598
  %v700 = vunpack.c.h.b16 %v598
  %v701 = vunpack.c.l.b16 %v599
  %v702 = vunpack.c.h.b16 %v599
  %v703 = vunpack.c.l.b16 %v600
  %v704 = vunpack.c.h.b16 %v600
  %v705 = vunpack.c.l.b16 %v601
  %v706 = vunpack.c.h.b16 %v601
  %v707 = vunpack.c.l.b16 %v602
  %v708 = vunpack.c.h.b16 %v602
  %v709 = vunpack.c.l.b16 %v603
  %v710 = vunpack.c.h.b16 %v603
  %v711 = vunpack.c.l.b16 %v604
  %v712 = vunpack.c.h.b16 %v604
  %v713 = vunpack.c.l.b16 %v605
  %v714 = vunpack.c.h.b16 %v605
  %v715 = vunpack.c.l.b16 %v606
  %v716 = vunpack.c.h.b16 %v606
  %v717 = vunpack.c.l.b16 %v607
  %v718 = vunpack.c.h.b16 %v607
  %v719 = vunpack.c.l.b16 %v608
  %v720 = vunpack.c.h.b16 %v608
  %v721 = vunpack.c.l.b16 %v609
  %v722 = vunpack.c.h.b16 %v609
  %v723 = vunpack.c.l.b16 %v610
  %v724 = vunpack.c.h.b16 %v610
  %v725 = vunpack.c.l.b16 %v611
  %v726 = vunpack.c.h.b16 %v611
  %v727 = vunpack.c.l.b16 %v612
  %v728 = vunpack.c.h.b16 %v612
  %v729 = vunpack.c.l.b16 %v613
  %v730 = vunpack.c.h.b16 %v613
  %v731 = vunpack.c.l.b16 %v614
  %v732 = vunpack.c.h.b16 %v614
  %v733 = vpack.c.b16 %v671, %v669
  %v734 = vpack.c.b16 %v672, %v670
  %v735 = vpack.c.b16 %v675, %v673
  %v736 = vpack.c.b16 %v676, %v674
  %v737 = vpack.c.b16 %v679, %v677
  %v738 = vpack.c.b16 %v680, %v678
  %v739 = vpack.c.b16 %v683, %v681
  %v740 = vpack.c.b16 %v684, %v682
  %v741 = vpack.c.b16 %v687, %v685
  %v742 = vpack.c.b16 %v688, %v686
  %v743 = vpack.c.b16 %v691, %v689
  %v744 = vpack.c.b16 %v692, %v690
  %v745 = vpack.c.b16 %v695, %v693
  %v746 = vpack.c.b16 %v696, %v694
  %v747 = vpack.c.b16 %v699, %v697
  %v748 = vpack.c.b16 %v700, %v698
  %v749 = vpack.c.b16 %v703, %v701
  %v750 = vpack.c.b16 %v704, %v702
  %v751 = vpack.c.b16 %v707, %v705
  %v752 = vpack.c.b16 %v708, %v706
  %v753 = vpack.c.b16 %v711, %v709
  %v754 = vpack.c.b16 %v712, %v710
  %v755 = vpack.c.b16 %v715, %v713
  %v756 = vpack.c.b16 %v716, %v714
  %v757 = vpack.c.b16 %v719, %v717
  %v758 = vpack.c.b16 %v720, %v718
  %v759 = vpack.c.b16 %v723, %v721
  %v760 = vpack.c.b16 %v724, %v722
  %v761 = vpack.c.b16 %v727, %v725
  %v762 = vpack.c.b16 %v728, %v726
  %v763 = vpack.c.b16 %v731, %v729
  %v764 = vpack.c.b16 %v732, %v730
  %797 = vmatprep.subr.bf16.mxu0 %v734
  %798 = vmatpush1.bf16.msra.mxu0 %v733
  %799 = vmatprep.subr.bf16.mxu0 %v736
  %800 = vmatpush1.bf16.msra.mxu0 %v735
  %801 = vmatprep.subr.bf16.mxu0 %v738
  %802 = vmatpush1.bf16.msra.mxu0 %v737
  %803 = vmatprep.subr.bf16.mxu0 %v740
  %804 = vmatpush1.bf16.msra.mxu0 %v739
  %805 = vmatprep.subr.bf16.mxu0 %v742
  %806 = vmatpush1.bf16.msra.mxu0 %v741
  %807 = vmatprep.subr.bf16.mxu0 %v744
  %808 = vmatpush1.bf16.msra.mxu0 %v743
  %809 = vmatprep.subr.bf16.mxu0 %v746
  %810 = vmatpush1.bf16.msra.mxu0 %v745
  %811 = vmatprep.subr.bf16.mxu0 %v748
  %812 = vmatpush1.bf16.msra.mxu0 %v747
  %813 = vmatprep.subr.bf16.mxu0 %v750
  %814 = vmatpush1.bf16.msra.mxu0 %v749
  %815 = vmatprep.subr.bf16.mxu0 %v752
  %816 = vmatpush1.bf16.msra.mxu0 %v751
  %817 = vmatprep.subr.bf16.mxu0 %v754
  %818 = vmatpush1.bf16.msra.mxu0 %v753
  %819 = vmatprep.subr.bf16.mxu0 %v756
  %820 = vmatpush1.bf16.msra.mxu0 %v755
  %821 = vmatprep.subr.bf16.mxu0 %v758
  %822 = vmatpush1.bf16.msra.mxu0 %v757
  %823 = vmatprep.subr.bf16.mxu0 %v760
  %824 = vmatpush1.bf16.msra.mxu0 %v759
  %825 = vmatprep.subr.bf16.mxu0 %v762
  %826 = vmatpush1.bf16.msra.mxu0 %v761
  %827 = vmatprep.subr.bf16.mxu0 %v764
  %828 = vmatpush1.bf16.msra.mxu0 %v763
  %829 = vmatprep.mubr.bf16.mxu0 %v634
  %830 = vmatmul.mubr.bf16.gmra.mrb[0].mxu0 %v633
  %v831 = vpop.f32.mrb[0].mxu0
  %v832 = vadd.f32 %v620, %v831
  %v833 = vpop.f32.mrb[0].mxu0
  %v834 = vadd.f32 %v624, %v833
  %v835 = vpop.f32.mrb[0].mxu0
  %v836 = vadd.f32 %v620, %v835
  %v837 = vpop.f32.mrb[0].mxu0
  %v838 = vadd.f32 %v624, %v837
  %839 = vdwg.mxu0
  %v840 = vpack.c.bf16 %v836, %v832
  %v841 = vpack.c.bf16 %v838, %v834
  %v844 = vunpack.c.l.b16 %v840
  %v845 = vunpack.c.l.b16 %v841
  %v846 = vunpack.c.h.b16 %v840
  %v847 = vunpack.c.h.b16 %v841
  %v848 = vpack.c.b16 %v845, %v844
  %v849 = vpack.c.b16 %v847, %v846
  %852 = vst [vmem:[%s11] sm:$0xff] %v848
  %853 = vst [vmem:[%s11 + $0x8] sm:$0xff] %v849
  // Predicated region
  $region38: #{multi_headed_attention.3} parent=0 // pred_check
    _
  $region39: #{multi_headed_attention.3} parent=0 // pred_check_branch
    %855 = sbr.rel (0) target = $region41
  $region40: #{multi_headed_attention.3} parent=0 // pred_region
    _
  $region41: #{multi_headed_attention.3} parent=0 // pred_fallthru
    _
  // Predicated region
  $region42: #{multi_headed_attention.3} parent=0 // pred_check
    _
  $region43: #{multi_headed_attention.3} parent=0 // pred_check_branch
    %857 = sbr.rel (0) target = $region45
  $region44: #{multi_headed_attention.3} parent=0 // pred_region
    _
  $region45: #{multi_headed_attention.3} parent=0 // pred_fallthru
    _
  // Predicated region
  $region46: #{multi_headed_attention.3} parent=0 // pred_check
    _
  $region47: #{multi_headed_attention.3} parent=0 // pred_check_branch
    %859 = sbr.rel (0) target = $region49
  $region48: #{multi_headed_attention.3} parent=0 // pred_region
    _
  $region49: #{multi_headed_attention.3} parent=0 // pred_fallthru
    _
  // Predicated region
  $region50: #{multi_headed_attention.3} parent=0 // pred_check
    _
  $region51: #{multi_headed_attention.3} parent=0 // pred_check_branch
    %861 = sbr.rel (0) target = $region53
  $region52: #{multi_headed_attention.3} parent=0 // pred_region
    _
  $region53: #{multi_headed_attention.3} parent=0 // pred_fallthru
    _
  // Predicated region
  $region54: #{multi_headed_attention.3} parent=0 // pred_check
    _
  $region55: #{multi_headed_attention.3} parent=0 // pred_check_branch
    %863 = sbr.rel (0) target = $region57
  $region56: #{multi_headed_attention.3} parent=0 // pred_region
    _
  $region57: #{multi_headed_attention.3} parent=0 // pred_fallthru
    _
  // Predicated region
  $region58: #{multi_headed_attention.3} parent=0 // pred_check
    _
  $region59: #{multi_headed_attention.3} parent=0 // pred_check_branch
    %865 = sbr.rel (0) target = $region61
  $region60: #{multi_headed_attention.3} parent=0 // pred_region
    _
  $region61: #{multi_headed_attention.3} parent=0 // pred_fallthru
    _

</llo_original>
